<compile_context>
chip_gen: v7x
topology: tpu7x:2x2x1
jax: 0.10.0
libtpu: 0.0.40
codegen_flags: <defaults>
</compile_context>

<pallas_src>
import jax
import jax.numpy as jnp
from jax.experimental import pallas as pl
from jax.experimental.pallas import tpu as pltpu

LANE = 128        # lane-dense pad width for every feature axis
BIAS_ROWS = 8     # sublane pad for the bias slab
N_WEIGHTS = 6     # w1, w2, w3, wd1, wd2, wd3 (biases packed in same order)


# ----------------------------- Pallas kernel -------------------------------

def gcn_graph_kernel(adj_ref, x_ref, pool_ref, w_ref, b_ref, out_ref):
    adj = adj_ref[0]          # (M, M)    bf16 block-diagonal normalized adjacency
    h = x_ref[0]              # (M, LANE) bf16 node features (padded lanes are 0)

    def graph_conv(h_b, idx):
        # aggregate-first (DGL order for in<=out): (adj @ h) @ W ; both matmuls
        # are bf16 x bf16 with f32 accumulation.  Padded lanes stay zero because
        # padded weight rows/cols and padded bias lanes are zero.
        agg = jnp.dot(adj, h_b, preferred_element_type=jnp.float32)
        agg = agg.astype(jnp.bfloat16)
        hw = jnp.dot(agg, w_ref[idx], preferred_element_type=jnp.float32)
        return jnp.maximum(hw + b_ref[idx:idx + 1, :], 0.0)        # (M, LANE) f32

    h = graph_conv(h, 0).astype(jnp.bfloat16)
    h = graph_conv(h, 1).astype(jnp.bfloat16)
    h3 = graph_conv(h, 2)                                          # (M, LANE) f32

    # dgl.mean_nodes for all GPS packed graphs as a single MXU matmul:
    # pool[g, :] has 1/n_g on graph g's own (valid) node rows, 0 elsewhere,
    # so padded / other-graph rows never leak into the pooled vector.
    hg = jnp.dot(pool_ref[0], h3, preferred_element_type=jnp.float32)  # (GPS, LANE)

    def dense(h_f32, idx, relu):
        y = (jnp.dot(h_f32.astype(jnp.bfloat16), w_ref[idx],
                     preferred_element_type=jnp.float32)
             + b_ref[idx:idx + 1, :])
        return jnp.maximum(y, 0.0) if relu else y

    h = dense(hg, 3, True)                                         # (GPS, LANE)
    h = dense(h, 4, True)                                          # (GPS, LANE)
    y = jax.nn.sigmoid(dense(h, 5, False))                         # lane 0 = prediction

    out_ref[0] = y                                                 # (GPS, LANE) f32 store


def gcn_graph_forward(adj_bd, x_bd, pool, w_slab, b_slab):
    """Batched GCNGraph forward.

    adj_bd : (S, M, M)    bf16  block-diag normalized adjacency (GPS graphs/step)
    x_bd   : (S, M, LANE) bf16  lane-padded node features
    pool   : (S, GPS, M)  f32   mean-node pooling matrices
    w_slab : (6, LANE, LANE) bf16, b_slab : (8, LANE) f32
    Returns (S*GPS,) sigmoid outputs.
    """
    S, M, _ = adj_bd.shape
    GPS = pool.shape[1]
    grid_spec = pltpu.PrefetchScalarGridSpec(
        num_scalar_prefetch=0,
        grid=(S,),
        in_specs=[
            pl.BlockSpec((1, M, M), lambda s: (s, 0, 0)),               # adjacency
            pl.BlockSpec((1, M, LANE), lambda s: (s, 0, 0)),            # features
            pl.BlockSpec((1, GPS, M), lambda s: (s, 0, 0)),             # pooling matrix
            pl.BlockSpec((N_WEIGHTS, LANE, LANE), lambda s: (0, 0, 0)), # weight slab (resident)
            pl.BlockSpec((BIAS_ROWS, LANE), lambda s: (0, 0)),          # bias slab (resident)
        ],
        out_specs=pl.BlockSpec((1, GPS, LANE), lambda s: (s, 0, 0)),
    )
    out = pl.pallas_call(
        gcn_graph_kernel,
        out_shape=jax.ShapeDtypeStruct((S, GPS, LANE), jnp.float32),
        grid_spec=grid_spec,
        compiler_params=pltpu.CompilerParams(dimension_semantics=("parallel",)),
    )(adj_bd, x_bd, pool, w_slab, b_slab)
    return out[:, :, 0].reshape(-1)


# ----------------------------- glue (plain JAX) -----------------------------

def build_norm_adj(src, dst, e_weight, num_nodes):
    """Dense D_in^{-1/2} A_w D_out^{-1/2} (DGL GraphConv norm='both') via one-hot
    matmuls instead of XLA scatter-adds (scatter serializes on TPU)."""
    src_oh = jax.nn.one_hot(src, num_nodes, dtype=jnp.float32)   # (E, N)
    dst_oh = jax.nn.one_hot(dst, num_nodes, dtype=jnp.float32)   # (E, N)
    adj = dst_oh.T @ (e_weight[:, None] * src_oh)                # adj[d, s] = sum_e w_e
    out_deg = jnp.clip(jnp.sum(src_oh, axis=0), 1.0, None)       # unweighted degrees (DGL)
    in_deg = jnp.clip(jnp.sum(dst_oh, axis=0), 1.0, None)
    return (in_deg ** -0.5)[:, None] * adj * (out_deg ** -0.5)[None, :]


def make_block_diag(adjs):
    """(GPS, N, N) per-graph adjacencies -> (GPS*N, GPS*N) block-diagonal matrix."""
    g, n, _ = adjs.shape
    eye = jnp.eye(g, dtype=adjs.dtype)
    return jnp.einsum("gh,gij->gihj", eye, adjs).reshape(g * n, g * n)


def make_pool(n_nodes_grp, n_graphs, n):
    """(GPS,) true node counts -> (GPS, GPS*N) mean-node pooling matrix."""
    node_graph = jnp.repeat(jnp.arange(n_graphs), n)             # (M,)
    node_pos = jnp.tile(jnp.arange(n), n_graphs)                 # (M,)
    valid = (node_pos < n_nodes_grp[node_graph]).astype(jnp.float32)
    onehot = jax.nn.one_hot(node_graph, n_graphs, dtype=jnp.float32)   # (M, GPS)
    denom = jnp.clip(n_nodes_grp, 1, None).astype(jnp.float32)   # guard empty graphs
    return (onehot * valid[:, None]).T / denom[:, None]          # (GPS, M)


def init_params(key, in_feats, h_feats):
    ks = jax.random.split(key, 12)

    def w(k, i, o):
        s = 1.0 / jnp.sqrt(i)
        return jax.random.uniform(k, (i, o), jnp.float32, -1.0, 1.0) * s

    return {
        # GraphConv weights (in, out); GraphConv bias init is zeros in DGL.
        "w1": w(ks[0], in_feats, h_feats), "b1": jnp.zeros((1, h_feats), jnp.float32),
        "w2": w(ks[1], h_feats, h_feats),  "b2": jnp.zeros((1, h_feats), jnp.float32),
        "w3": w(ks[2], h_feats, h_feats),  "b3": jnp.zeros((1, h_feats), jnp.float32),
        # Linear layers stored transposed to (in, out) so the kernel does h @ W.
        "wd1": w(ks[3], h_feats, 16), "bd1": w(ks[4], 1, 16),
        "wd2": w(ks[5], 16, 8),       "bd2": w(ks[6], 1, 8),
        "wd3": w(ks[7], 8, 1),        "bd3": w(ks[8], 1, 1),
    }


def pack_params(p):
    """Zero-pad weights/biases to lane-dense slabs: (6,128,128) bf16, (8,128) f32."""
    def pad_w(w):
        out = jnp.zeros((LANE, LANE), jnp.float32)
        return out.at[: w.shape[0], : w.shape[1]].set(w)

    def pad_b(b):
        out = jnp.zeros((LANE,), jnp.float32)
        return out.at[: b.shape[-1]].set(b.reshape(-1))

    w_slab = jnp.stack([pad_w(p["w1"]), pad_w(p["w2"]), pad_w(p["w3"]),
                        pad_w(p["wd1"]), pad_w(p["wd2"]), pad_w(p["wd3"])])
    w_slab = w_slab.astype(jnp.bfloat16)
    b_slab = jnp.zeros((BIAS_ROWS, LANE), jnp.float32)
    for i, bk in enumerate(["b1", "b2", "b3", "bd1", "bd2", "bd3"]):
        b_slab = b_slab.at[i].set(pad_b(p[bk]))
    return w_slab, b_slab


def reference_forward(adj_norm, x, p):
    h = x
    for wk, bk in (("w1", "b1"), ("w2", "b2"), ("w3", "b3")):
        h = jnp.maximum((adj_norm @ h) @ p[wk] + p[bk], 0.0)
    hg = jnp.mean(h, axis=0, keepdims=True)
    h = jnp.maximum(hg @ p["wd1"] + p["bd1"], 0.0)
    h = jnp.maximum(h @ p["wd2"] + p["bd2"], 0.0)
    return jax.nn.sigmoid(h @ p["wd3"] + p["bd3"])


if __name__ == "__main__":
    B, N, E = 16, 16, 48                 # graphs per batch, nodes/graph, edges/graph
    GPS = 8                              # graphs packed block-diagonally per grid step
    IN_FEATS, H_FEATS = 8, 32
    assert B % GPS == 0
    S = B // GPS                         # 2 grid steps -> feeds both v7x TensorCores
    M = GPS * N                          # 128 node rows per step -> full MXU tiles

    key = jax.random.PRNGKey(0)
    k_feat, k_src, k_dst, k_w, k_par = jax.random.split(key, 5)

    x = jax.random.normal(k_feat, (B, N, IN_FEATS), jnp.float32)
    src = jax.random.randint(k_src, (B, E), 0, N)
    dst = jax.random.randint(k_dst, (B, E), 0, N)
    e_weight = jax.random.uniform(k_w, (B, E), jnp.float32, 0.1, 1.0)

    adj = jax.vmap(build_norm_adj, in_axes=(0, 0, 0, None))(src, dst, e_weight, N)
    n_nodes = jnp.full((B,), N, jnp.int32)       # true node counts (no node padding here)

    params = init_params(k_par, IN_FEATS, H_FEATS)
    w_slab, b_slab = pack_params(params)

    # Block-diagonal packing: GPS graphs -> one (M, M) adjacency / (M, LANE) features.
    adj_bd = jax.vmap(make_block_diag)(adj.reshape(S, GPS, N, N)).astype(jnp.bfloat16)
    x_pad = jnp.zeros((B, N, LANE), jnp.float32).at[:, :, :IN_FEATS].set(x)
    x_bd = x_pad.reshape(S, M, LANE).astype(jnp.bfloat16)
    pool = jax.vmap(make_pool, in_axes=(0, None, None))(n_nodes.reshape(S, GPS), GPS, N)

    out = gcn_graph_forward(adj_bd, x_bd, pool, w_slab, b_slab)
    out = jax.block_until_ready(out)

    ref = jax.vmap(reference_forward, in_axes=(0, 0, None))(adj, x, params)[:, 0, 0]
    assert out.shape == (B,)
    # bf16 inputs / f32 accumulation vs. the f32 reference -> relaxed tolerance.
    assert jnp.allclose(out, ref, atol=3e-2, rtol=3e-2), (out, ref)
    print("KERNEL_OK")
</pallas_src>

<mosaic_0001>
module attributes {stable_mosaic.version = 11 : i64} {
  func.func @gcn_graph_kernel(%arg0: i32, %arg1: memref<1x128x128xbf16, #tpu.memory_space<vmem>>, %arg2: memref<1x128x128xbf16, #tpu.memory_space<vmem>>, %arg3: memref<1x8x128xf32, #tpu.memory_space<vmem>>, %arg4: memref<6x128x128xbf16, #tpu.memory_space<vmem>>, %arg5: memref<8x128xf32, #tpu.memory_space<vmem>>, %arg6: memref<1x8x128xf32, #tpu.memory_space<vmem>>) attributes {dimension_semantics = [#tpu.dimension_semantics<parallel>], iteration_bounds = array<i64: 2>, scalar_prefetch = 0 : i64, scratch_operands = 0 : i64, tpu.core_type = #tpu.core_type<tc>, window_params = [{transform_indices = @transform_0, window_bounds = array<i64: 1, 128, 128>}, {transform_indices = @transform_1, window_bounds = array<i64: 1, 128, 128>}, {transform_indices = @transform_2, window_bounds = array<i64: 1, 8, 128>}, {pipeline_mode = #tpu.pipeline_mode<synchronous>, transform_indices = @transform_3, window_bounds = array<i64: 6, 128, 128>}, {pipeline_mode = #tpu.pipeline_mode<synchronous>, transform_indices = @transform_4, window_bounds = array<i64: 8, 128>}, {transform_indices = @transform_5, window_bounds = array<i64: 1, 8, 128>}]} {
    %c0 = arith.constant 0 : index
    %c0_0 = arith.constant 0 : index
    %c0_1 = arith.constant 0 : index
    %0 = vector.load %arg1[%c0, %c0_0, %c0_1] : memref<1x128x128xbf16, #tpu.memory_space<vmem>>, vector<1x128x128xbf16>
    %1 = vector.shape_cast %0 : vector<1x128x128xbf16> to vector<128x128xbf16>
    %c0_2 = arith.constant 0 : index
    %c0_3 = arith.constant 0 : index
    %c0_4 = arith.constant 0 : index
    %2 = vector.load %arg2[%c0_2, %c0_3, %c0_4] : memref<1x128x128xbf16, #tpu.memory_space<vmem>>, vector<1x128x128xbf16>
    %3 = vector.shape_cast %2 : vector<1x128x128xbf16> to vector<128x128xbf16>
    %cst = arith.constant dense<0.000000e+00> : vector<128x128xf32>
    %4 = tpu.matmul %1, %3, %cst {dimension_numbers = #tpu.dot_dimension_numbers<[1], [0], [0], [1], [0, 0, 1, 1], [], []>} : vector<128x128xbf16>, vector<128x128xbf16>, vector<128x128xf32> -> vector<128x128xf32>
    %5 = arith.truncf %4 : vector<128x128xf32> to vector<128x128xbf16>
    %c0_5 = arith.constant 0 : index
    %c0_6 = arith.constant 0 : index
    %c0_7 = arith.constant 0 : index
    %6 = vector.load %arg4[%c0_5, %c0_6, %c0_7] : memref<6x128x128xbf16, #tpu.memory_space<vmem>>, vector<1x128x128xbf16>
    %7 = vector.shape_cast %6 : vector<1x128x128xbf16> to vector<128x128xbf16>
    %cst_8 = arith.constant dense<0.000000e+00> : vector<128x128xf32>
    %8 = tpu.matmul %5, %7, %cst_8 {dimension_numbers = #tpu.dot_dimension_numbers<[1], [0], [0], [1], [0, 0, 1, 1], [], []>} : vector<128x128xbf16>, vector<128x128xbf16>, vector<128x128xf32> -> vector<128x128xf32>
    %c0_9 = arith.constant 0 : index
    %c0_10 = arith.constant 0 : index
    %9 = vector.load %arg5[%c0_9, %c0_10] : memref<8x128xf32, #tpu.memory_space<vmem>>, vector<1x128xf32>
    %10 = vector.broadcast %9 : vector<1x128xf32> to vector<128x128xf32>
    %11 = arith.addf %8, %10 : vector<128x128xf32>
    %cst_11 = arith.constant 0.000000e+00 : f32
    %12 = vector.broadcast %cst_11 : f32 to vector<128x128xf32>
    %13 = arith.maximumf %11, %12 : vector<128x128xf32>
    %14 = arith.truncf %13 : vector<128x128xf32> to vector<128x128xbf16>
    %cst_12 = arith.constant dense<0.000000e+00> : vector<128x128xf32>
    %15 = tpu.matmul %1, %14, %cst_12 {dimension_numbers = #tpu.dot_dimension_numbers<[1], [0], [0], [1], [0, 0, 1, 1], [], []>} : vector<128x128xbf16>, vector<128x128xbf16>, vector<128x128xf32> -> vector<128x128xf32>
    %16 = arith.truncf %15 : vector<128x128xf32> to vector<128x128xbf16>
    %c1 = arith.constant 1 : index
    %c0_13 = arith.constant 0 : index
    %c0_14 = arith.constant 0 : index
    %17 = vector.load %arg4[%c1, %c0_13, %c0_14] : memref<6x128x128xbf16, #tpu.memory_space<vmem>>, vector<1x128x128xbf16>
    %18 = vector.shape_cast %17 : vector<1x128x128xbf16> to vector<128x128xbf16>
    %cst_15 = arith.constant dense<0.000000e+00> : vector<128x128xf32>
    %19 = tpu.matmul %16, %18, %cst_15 {dimension_numbers = #tpu.dot_dimension_numbers<[1], [0], [0], [1], [0, 0, 1, 1], [], []>} : vector<128x128xbf16>, vector<128x128xbf16>, vector<128x128xf32> -> vector<128x128xf32>
    %c1_16 = arith.constant 1 : index
    %c0_17 = arith.constant 0 : index
    %20 = vector.load %arg5[%c1_16, %c0_17] : memref<8x128xf32, #tpu.memory_space<vmem>>, vector<1x128xf32>
    %21 = vector.broadcast %20 : vector<1x128xf32> to vector<128x128xf32>
    %22 = arith.addf %19, %21 : vector<128x128xf32>
    %cst_18 = arith.constant 0.000000e+00 : f32
    %23 = vector.broadcast %cst_18 : f32 to vector<128x128xf32>
    %24 = arith.maximumf %22, %23 : vector<128x128xf32>
    %25 = arith.truncf %24 : vector<128x128xf32> to vector<128x128xbf16>
    %cst_19 = arith.constant dense<0.000000e+00> : vector<128x128xf32>
    %26 = tpu.matmul %1, %25, %cst_19 {dimension_numbers = #tpu.dot_dimension_numbers<[1], [0], [0], [1], [0, 0, 1, 1], [], []>} : vector<128x128xbf16>, vector<128x128xbf16>, vector<128x128xf32> -> vector<128x128xf32>
    %27 = arith.truncf %26 : vector<128x128xf32> to vector<128x128xbf16>
    %c2 = arith.constant 2 : index
    %c0_20 = arith.constant 0 : index
    %c0_21 = arith.constant 0 : index
    %28 = vector.load %arg4[%c2, %c0_20, %c0_21] : memref<6x128x128xbf16, #tpu.memory_space<vmem>>, vector<1x128x128xbf16>
    %29 = vector.shape_cast %28 : vector<1x128x128xbf16> to vector<128x128xbf16>
    %cst_22 = arith.constant dense<0.000000e+00> : vector<128x128xf32>
    %30 = tpu.matmul %27, %29, %cst_22 {dimension_numbers = #tpu.dot_dimension_numbers<[1], [0], [0], [1], [0, 0, 1, 1], [], []>} : vector<128x128xbf16>, vector<128x128xbf16>, vector<128x128xf32> -> vector<128x128xf32>
    %c2_23 = arith.constant 2 : index
    %c0_24 = arith.constant 0 : index
    %31 = vector.load %arg5[%c2_23, %c0_24] : memref<8x128xf32, #tpu.memory_space<vmem>>, vector<1x128xf32>
    %32 = vector.broadcast %31 : vector<1x128xf32> to vector<128x128xf32>
    %33 = arith.addf %30, %32 : vector<128x128xf32>
    %cst_25 = arith.constant 0.000000e+00 : f32
    %34 = vector.broadcast %cst_25 : f32 to vector<128x128xf32>
    %35 = arith.maximumf %33, %34 : vector<128x128xf32>
    %c0_26 = arith.constant 0 : index
    %c0_27 = arith.constant 0 : index
    %c0_28 = arith.constant 0 : index
    %36 = vector.load %arg3[%c0_26, %c0_27, %c0_28] : memref<1x8x128xf32, #tpu.memory_space<vmem>>, vector<1x8x128xf32>
    %37 = vector.shape_cast %36 : vector<1x8x128xf32> to vector<8x128xf32>
    %cst_29 = arith.constant dense<0.000000e+00> : vector<8x128xf32>
    %38 = tpu.matmul %37, %35, %cst_29 {dimension_numbers = #tpu.dot_dimension_numbers<[1], [0], [0], [1], [0, 0, 1, 1], [], []>} : vector<8x128xf32>, vector<128x128xf32>, vector<8x128xf32> -> vector<8x128xf32>
    %39 = arith.truncf %38 : vector<8x128xf32> to vector<8x128xbf16>
    %c3 = arith.constant 3 : index
    %c0_30 = arith.constant 0 : index
    %c0_31 = arith.constant 0 : index
    %40 = vector.load %arg4[%c3, %c0_30, %c0_31] : memref<6x128x128xbf16, #tpu.memory_space<vmem>>, vector<1x128x128xbf16>
    %41 = vector.shape_cast %40 : vector<1x128x128xbf16> to vector<128x128xbf16>
    %cst_32 = arith.constant dense<0.000000e+00> : vector<8x128xf32>
    %42 = tpu.matmul %39, %41, %cst_32 {dimension_numbers = #tpu.dot_dimension_numbers<[1], [0], [0], [1], [0, 0, 1, 1], [], []>} : vector<8x128xbf16>, vector<128x128xbf16>, vector<8x128xf32> -> vector<8x128xf32>
    %c3_33 = arith.constant 3 : index
    %c0_34 = arith.constant 0 : index
    %43 = vector.load %arg5[%c3_33, %c0_34] : memref<8x128xf32, #tpu.memory_space<vmem>>, vector<1x128xf32>
    %44 = vector.broadcast %43 : vector<1x128xf32> to vector<8x128xf32>
    %45 = arith.addf %42, %44 : vector<8x128xf32>
    %cst_35 = arith.constant 0.000000e+00 : f32
    %46 = vector.broadcast %cst_35 : f32 to vector<8x128xf32>
    %47 = arith.maximumf %45, %46 : vector<8x128xf32>
    %48 = arith.truncf %47 : vector<8x128xf32> to vector<8x128xbf16>
    %c4 = arith.constant 4 : index
    %c0_36 = arith.constant 0 : index
    %c0_37 = arith.constant 0 : index
    %49 = vector.load %arg4[%c4, %c0_36, %c0_37] : memref<6x128x128xbf16, #tpu.memory_space<vmem>>, vector<1x128x128xbf16>
    %50 = vector.shape_cast %49 : vector<1x128x128xbf16> to vector<128x128xbf16>
    %cst_38 = arith.constant dense<0.000000e+00> : vector<8x128xf32>
    %51 = tpu.matmul %48, %50, %cst_38 {dimension_numbers = #tpu.dot_dimension_numbers<[1], [0], [0], [1], [0, 0, 1, 1], [], []>} : vector<8x128xbf16>, vector<128x128xbf16>, vector<8x128xf32> -> vector<8x128xf32>
    %c4_39 = arith.constant 4 : index
    %c0_40 = arith.constant 0 : index
    %52 = vector.load %arg5[%c4_39, %c0_40] : memref<8x128xf32, #tpu.memory_space<vmem>>, vector<1x128xf32>
    %53 = vector.broadcast %52 : vector<1x128xf32> to vector<8x128xf32>
    %54 = arith.addf %51, %53 : vector<8x128xf32>
    %cst_41 = arith.constant 0.000000e+00 : f32
    %55 = vector.broadcast %cst_41 : f32 to vector<8x128xf32>
    %56 = arith.maximumf %54, %55 : vector<8x128xf32>
    %57 = arith.truncf %56 : vector<8x128xf32> to vector<8x128xbf16>
    %c5 = arith.constant 5 : index
    %c0_42 = arith.constant 0 : index
    %c0_43 = arith.constant 0 : index
    %58 = vector.load %arg4[%c5, %c0_42, %c0_43] : memref<6x128x128xbf16, #tpu.memory_space<vmem>>, vector<1x128x128xbf16>
    %59 = vector.shape_cast %58 : vector<1x128x128xbf16> to vector<128x128xbf16>
    %cst_44 = arith.constant dense<0.000000e+00> : vector<8x128xf32>
    %60 = tpu.matmul %57, %59, %cst_44 {dimension_numbers = #tpu.dot_dimension_numbers<[1], [0], [0], [1], [0, 0, 1, 1], [], []>} : vector<8x128xbf16>, vector<128x128xbf16>, vector<8x128xf32> -> vector<8x128xf32>
    %c5_45 = arith.constant 5 : index
    %c0_46 = arith.constant 0 : index
    %61 = vector.load %arg5[%c5_45, %c0_46] : memref<8x128xf32, #tpu.memory_space<vmem>>, vector<1x128xf32>
    %62 = vector.broadcast %61 : vector<1x128xf32> to vector<8x128xf32>
    %63 = arith.addf %60, %62 : vector<8x128xf32>
    %64 = arith.negf %63 : vector<8x128xf32>
    %65 = math.exp %64 : vector<8x128xf32>
    %cst_47 = arith.constant 1.000000e+00 : f32
    %66 = vector.broadcast %cst_47 : f32 to vector<8x128xf32>
    %67 = arith.addf %66, %65 : vector<8x128xf32>
    %68 = arith.divf %66, %67 : vector<8x128xf32>
    %c0_48 = arith.constant 0 : index
    %c0_49 = arith.constant 0 : index
    %c0_50 = arith.constant 0 : index
    %69 = vector.load %arg6[%c0_48, %c0_49, %c0_50] : memref<1x8x128xf32, #tpu.memory_space<vmem>>, vector<1x8x128xf32>
    %70 = vector.shape_cast %69 : vector<1x8x128xf32> to vector<8x128xf32>
    %71 = vector.shape_cast %68 : vector<8x128xf32> to vector<1x8x128xf32>
    tpu.vector_store %arg6[%c0_48, %c0_49, %c0_50], %71 {strides = array<i32>} : memref<1x8x128xf32, #tpu.memory_space<vmem>>, vector<1x8x128xf32>,
    return
  }
  func.func @transform_0(%arg0: i32) -> (i32, i32, i32) {
    %c0_i32 = arith.constant 0 : i32
    %c0_i32_0 = arith.constant 0 : i32
    %c0_i32_1 = arith.constant 0 : i32
    return %arg0, %c0_i32, %c0_i32_0 : i32, i32, i32
  }
  func.func @transform_1(%arg0: i32) -> (i32, i32, i32) {
    %c0_i32 = arith.constant 0 : i32
    %c0_i32_0 = arith.constant 0 : i32
    %c0_i32_1 = arith.constant 0 : i32
    return %arg0, %c0_i32, %c0_i32_0 : i32, i32, i32
  }
  func.func @transform_2(%arg0: i32) -> (i32, i32, i32) {
    %c0_i32 = arith.constant 0 : i32
    %c0_i32_0 = arith.constant 0 : i32
    %c0_i32_1 = arith.constant 0 : i32
    return %arg0, %c0_i32, %c0_i32_0 : i32, i32, i32
  }
  func.func @transform_3(%arg0: i32) -> (i32, i32, i32) {
    %c0_i32 = arith.constant 0 : i32
    %c0_i32_0 = arith.constant 0 : i32
    %c0_i32_1 = arith.constant 0 : i32
    %c0_i32_2 = arith.constant 0 : i32
    return %c0_i32, %c0_i32_0, %c0_i32_1 : i32, i32, i32
  }
  func.func @transform_4(%arg0: i32) -> (i32, i32) {
    %c0_i32 = arith.constant 0 : i32
    %c0_i32_0 = arith.constant 0 : i32
    %c0_i32_1 = arith.constant 0 : i32
    return %c0_i32, %c0_i32_0 : i32, i32
  }
  func.func @transform_5(%arg0: i32) -> (i32, i32, i32) {
    %c0_i32 = arith.constant 0 : i32
    %c0_i32_0 = arith.constant 0 : i32
    %c0_i32_1 = arith.constant 0 : i32
    return %arg0, %c0_i32, %c0_i32_0 : i32, i32, i32
  }
}

</mosaic_0001>

<llo_original>
// kernel: tpu_custom_call.1
$region0: #{tpu_custom_call.1}
  #allocation0 [shape = 'u32[]', space=smem, size = 0x4, offset = 0x4, fixed_abs, tag = 'smem constant byte address 0x4 - core index']
  #allocation1 [shape = 'u32[144,128]{1,0:T(1,128)}', space=vmem, size = 0x12000, scoped, tag = 'internal scratch']
  %s0 = inlined_call_operand.hbm [shape: bf16[2,128,128], index: 0, kind: input, shape index: {}]
  %s1 = inlined_call_operand.hbm [shape: bf16[2,128,128], index: 1, kind: input, shape index: {}]
  %s2 = inlined_call_operand.hbm [shape: f32[2,8,128], index: 2, kind: input, shape index: {}]
  %s3 = inlined_call_operand.hbm [shape: bf16[6,128,128], index: 3, kind: input, shape index: {}]
  %s4 = inlined_call_operand.vmem [shape: f32[8,128], index: 4, kind: input, shape index: {}]
  %s5 = inlined_call_operand.hbm [shape: f32[2,8,128], index: 5, kind: output, shape index: {}]
  %s6 = sld [smem:[#allocation0]]
  $region69: #{tpu_custom_call.1} parent=0
    _
  %s8 = ssub.s32 1, %s6
  %s9 = scalar_select 0, %s8, %s6
  $region1: #{tpu_custom_call.1} parent=0
    #allocation2 [shape = 'u8[65536]{0}', space=vmem, size = 0x10000, scoped, tag = 'input window, operand 0']
    #allocation3 [shape = 's32[2]{0}', space=sflag, size = 0x8, scoped, tag = 'scoped memory for tpu_custom_call.1']
    #allocation4 [shape = 's32[2]{0}', space=sflag, size = 0x8, scoped, tag = 'scoped memory for tpu_custom_call.1']
    #allocation5 [shape = 'u8[65536]{0}', space=vmem, size = 0x10000, scoped, tag = 'input window, operand 1']
    #allocation6 [shape = 's32[2]{0}', space=sflag, size = 0x8, scoped, tag = 'scoped memory for tpu_custom_call.1']
    #allocation7 [shape = 'u8[8192]{0}', space=vmem, size = 0x2000, scoped, tag = 'input window, operand 2']
    #allocation8 [shape = 'u8[196608]{0}', space=vmem, size = 0x30000, scoped, tag = 'input window, operand 3, single buffered']
    #allocation9 [shape = 's32[1]{0}', space=sflag, size = 0x4, scoped, tag = 'scoped memory for tpu_custom_call.1']
    #allocation10 [shape = 'u8[8192]{0}', space=vmem, size = 0x2000, scoped, tag = 'output window, operand 0']
    %10 = vsyncpa [#allocation3], 0
    %s11 = scalar_lea.sflag [#allocation3], 1
    %12 = vsyncpa %s11, 0
    %13 = vsyncpa [#allocation6], 0
    %s14 = scalar_lea.sflag [#allocation6], 1
    %15 = vsyncpa %s14, 0
    %16 = vsyncpa [#allocation9], 0
    %17 = vsyncpa [#allocation4], 0
    %s18 = scalar_lea.sflag [#allocation4], 1
    %19 = vsyncpa %s18, 0
    loop: start=0, step=1, limit=4
    $region2: #{tpu_custom_call.1} parent=1 // loop_pre_header
      _
    $region3: #{tpu_custom_call.1} parent=1 // loop_header
      %s21 = sphi 0, %s25
      %p22 = scmp.ge.s32.totalorder %s21, 4
      %s31 = sphi 0, %s33
      %s34 = sphi 0, %s31
      %s35 = sphi 0, %s34
      %s51 = sphi 0, %s35
      %s57 = sphi 0, %s59
      %s60 = sphi 0, %s57
      %s61 = sphi 0, %s60
      %s77 = sphi 0, %s61
      %s83 = sphi 0, %s85
      %s86 = sphi 0, %s83
      %s87 = sphi 0, %s86
      %s103 = sphi 0, %s87
      %s107 = sphi 0, %s107
      %s109 = sphi 0, %s107
      %s110 = sphi 0, %s109
      %s124 = sphi 0, %s110
      %s128 = sphi 0, %s128
      %s130 = sphi 0, %s128
      %s131 = sphi 0, %s130
      %s145 = sphi 0, %s131
      %s151 = sphi 0, %s153
      %s154 = sphi 0, %s151
      %s155 = sphi 0, %s154
      %s171 = sphi 0, %s155
    $region4: #{tpu_custom_call.1} parent=1 // loop_header_branch
      %24 = sbr.rel (%p22) target = $region8
    $region5: #{tpu_custom_call.1} parent=1 // loop_body
      %s26 = ssub.s32 %s21, 1
      %s27 = ssub.s32 %s21, 2
      %s28 = sadd.s32 %s21, 1
      %s29 = ssub.s32 %s21, %s28
      %p30 = scmp.eq.s32.totalorder %s29, 0
      %s32 = sadd.s32 %s31, 1
      %s33 = scalar_select %p30, %s31, %s32
      %p36 = pneg %p30
      %p37 = scmp.eq.s32.totalorder %s21, 1
      %p38 = por %p36, %p37
      %p39 = scmp.ne.s32.totalorder %s31, %s34
      %p40 = scmp.eq.s32.totalorder %s21, 0
      %p41 = por %p39, %p40
      %p42 = scmp.ne.s32.totalorder %s31, %s34
      %p43 = scmp.eq.s32.totalorder %s26, 1
      %p44 = por %p42, %p43
      %p45 = scmp.ne.s32.totalorder %s34, %s35
      %p46 = scmp.eq.s32.totalorder %s26, 0
      %p47 = por %p45, %p46
      %p48 = scmp.ne.s32.totalorder %s34, %s35
      %p49 = scmp.eq.s32.totalorder %s27, 1
      %p50 = por %p48, %p49
      %p52 = scmp.ne.s32.totalorder %s35, %s51
      %p53 = scmp.eq.s32.totalorder %s27, 0
      %p54 = por %p52, %p53
      %s55 = ssub.s32 %s21, %s28
      %p56 = scmp.eq.s32.totalorder %s55, 0
      %s58 = sadd.s32 %s57, 1
      %s59 = scalar_select %p56, %s57, %s58
      %p62 = pneg %p56
      %p63 = scmp.eq.s32.totalorder %s21, 1
      %p64 = por %p62, %p63
      %p65 = scmp.ne.s32.totalorder %s57, %s60
      %p66 = scmp.eq.s32.totalorder %s21, 0
      %p67 = por %p65, %p66
      %p68 = scmp.ne.s32.totalorder %s57, %s60
      %p69 = scmp.eq.s32.totalorder %s26, 1
      %p70 = por %p68, %p69
      %p71 = scmp.ne.s32.totalorder %s60, %s61
      %p72 = scmp.eq.s32.totalorder %s26, 0
      %p73 = por %p71, %p72
      %p74 = scmp.ne.s32.totalorder %s60, %s61
      %p75 = scmp.eq.s32.totalorder %s27, 1
      %p76 = por %p74, %p75
      %p78 = scmp.ne.s32.totalorder %s61, %s77
      %p79 = scmp.eq.s32.totalorder %s27, 0
      %p80 = por %p78, %p79
      %s81 = ssub.s32 %s21, %s28
      %p82 = scmp.eq.s32.totalorder %s81, 0
      %s84 = sadd.s32 %s83, 1
      %s85 = scalar_select %p82, %s83, %s84
      %p88 = pneg %p82
      %p89 = scmp.eq.s32.totalorder %s21, 1
      %p90 = por %p88, %p89
      %p91 = scmp.ne.s32.totalorder %s83, %s86
      %p92 = scmp.eq.s32.totalorder %s21, 0
      %p93 = por %p91, %p92
      %p94 = scmp.ne.s32.totalorder %s83, %s86
      %p95 = scmp.eq.s32.totalorder %s26, 1
      %p96 = por %p94, %p95
      %p97 = scmp.ne.s32.totalorder %s86, %s87
      %p98 = scmp.eq.s32.totalorder %s26, 0
      %p99 = por %p97, %p98
      %p100 = scmp.ne.s32.totalorder %s86, %s87
      %p101 = scmp.eq.s32.totalorder %s27, 1
      %p102 = por %p100, %p101
      %p104 = scmp.ne.s32.totalorder %s87, %s103
      %p105 = scmp.eq.s32.totalorder %s27, 0
      %p106 = por %p104, %p105
      %s108 = sadd.s32 %s107, 1
      %p111 = scmp.eq.s32.totalorder %s21, 1
      %p112 = scmp.ne.s32.totalorder %s107, %s109
      %p113 = scmp.eq.s32.totalorder %s21, 0
      %p114 = por %p112, %p113
      %p115 = scmp.ne.s32.totalorder %s107, %s109
      %p116 = scmp.eq.s32.totalorder %s26, 1
      %p117 = por %p115, %p116
      %p118 = scmp.ne.s32.totalorder %s109, %s110
      %p119 = scmp.eq.s32.totalorder %s26, 0
      %p120 = por %p118, %p119
      %p121 = scmp.ne.s32.totalorder %s109, %s110
      %p122 = scmp.eq.s32.totalorder %s27, 1
      %p123 = por %p121, %p122
      %p125 = scmp.ne.s32.totalorder %s110, %s124
      %p126 = scmp.eq.s32.totalorder %s27, 0
      %p127 = por %p125, %p126
      %s129 = sadd.s32 %s128, 1
      %p132 = scmp.eq.s32.totalorder %s21, 1
      %p133 = scmp.ne.s32.totalorder %s128, %s130
      %p134 = scmp.eq.s32.totalorder %s21, 0
      %p135 = por %p133, %p134
      %p136 = scmp.ne.s32.totalorder %s128, %s130
      %p137 = scmp.eq.s32.totalorder %s26, 1
      %p138 = por %p136, %p137
      %p139 = scmp.ne.s32.totalorder %s130, %s131
      %p140 = scmp.eq.s32.totalorder %s26, 0
      %p141 = por %p139, %p140
      %p142 = scmp.ne.s32.totalorder %s130, %s131
      %p143 = scmp.eq.s32.totalorder %s27, 1
      %p144 = por %p142, %p143
      %p146 = scmp.ne.s32.totalorder %s131, %s145
      %p147 = scmp.eq.s32.totalorder %s27, 0
      %p148 = por %p146, %p147
      %s149 = ssub.s32 %s21, %s28
      %p150 = scmp.eq.s32.totalorder %s149, 0
      %s152 = sadd.s32 %s151, 1
      %s153 = scalar_select %p150, %s151, %s152
      %p156 = pneg %p150
      %p157 = scmp.eq.s32.totalorder %s21, 1
      %p158 = por %p156, %p157
      %p159 = scmp.ne.s32.totalorder %s151, %s154
      %p160 = scmp.eq.s32.totalorder %s21, 0
      %p161 = por %p159, %p160
      %p162 = scmp.ne.s32.totalorder %s151, %s154
      %p163 = scmp.eq.s32.totalorder %s26, 1
      %p164 = por %p162, %p163
      %p165 = scmp.ne.s32.totalorder %s154, %s155
      %p166 = scmp.eq.s32.totalorder %s26, 0
      %p167 = por %p165, %p166
      %p168 = scmp.ne.s32.totalorder %s154, %s155
      %p169 = scmp.eq.s32.totalorder %s27, 1
      %p170 = por %p168, %p169
      %p172 = scmp.ne.s32.totalorder %s155, %s171
      %p173 = scmp.eq.s32.totalorder %s27, 0
      %p174 = por %p172, %p173
      %p175 = scmp.le.s32.totalorder 1, %s21
      %p176 = scmp.lt.s32.totalorder %s21, 3
      %p177 = pnand %p175, %p176
      %p178 = pneg %p177
      // Predicated region
      $region9: #{tpu_custom_call.1} parent=5 // pred_check
        _
      $region10: #{tpu_custom_call.1} parent=5 // pred_check_branch
        %180 = sbr.rel (%p177) target = $region12
      $region11: #{tpu_custom_call.1} parent=5 // pred_region
        %s181 = ssub.s32 %s21, 1
        // Predicated region
        $region13: #{tpu_custom_call.1} parent=11 // pred_check
          %p182 = pneg %p120
        $region14: #{tpu_custom_call.1} parent=11 // pred_check_branch
          %184 = sbr.rel (%p182) target = $region16
        $region15: #{tpu_custom_call.1} parent=11 // pred_region
          %s186 = ssub.s32 6144, 6144
          %187 = vsyncadd [#allocation9], %s186
          %s188 = sshll.u32 [#allocation8], 4
          %s189 = int_to_ptr.vmem [resolvable:$true] %s188
          %194 = dma.hbm_to_vmem [thread:$0]  %s3, 6144, %s189, [#allocation9], 64, 64, 4
        $region16: #{tpu_custom_call.1} parent=11 // pred_fallthru
          _
        // Predicated region
        $region17: #{tpu_custom_call.1} parent=11 // pred_check
          %p195 = pneg %p141
        $region18: #{tpu_custom_call.1} parent=11 // pred_check_branch
          %197 = sbr.rel (%p195) target = $region20
        $region19: #{tpu_custom_call.1} parent=11 // pred_region
          _
        $region20: #{tpu_custom_call.1} parent=11 // pred_fallthru
          _
      $region12: #{tpu_custom_call.1} parent=5 // pred_fallthru
        _
      %p198 = scmp.lt.s32.totalorder %s21, 2
      // Predicated region
      $region21: #{tpu_custom_call.1} parent=5 // pred_check
        %p199 = pneg %p198
      $region22: #{tpu_custom_call.1} parent=5 // pred_check_branch
        %201 = sbr.rel (%p199) target = $region24
      $region23: #{tpu_custom_call.1} parent=5 // pred_region
        // Predicated region
        $region25: #{tpu_custom_call.1} parent=23 // pred_check
          %p202 = pneg %p41
        $region26: #{tpu_custom_call.1} parent=23 // pred_check_branch
          %204 = sbr.rel (%p202) target = $region28
        $region27: #{tpu_custom_call.1} parent=23 // pred_region
          %s205 = sand.u32 %s31, 1
          %s206 = scalar_lea.sflag [#allocation3], %s205
          %s207 = sand.u32 %s31, 1
          %s208 = smul.addr %s207, 64
          %s209 = scalar_lea.vmem [#allocation2], %s208
          %s211 = ssub.s32 1024, 1024
          %212 = vsyncadd %s206, %s211
          %s213 = smul.addr %s21, 16
          %s214 = smul.addr %s213, 64
          %s215 = scalar_lea.hbm %s0, %s214
          %s216 = sshll.u32 %s209, 4
          %s217 = int_to_ptr.vmem [resolvable:$true] %s216
          %222 = dma.hbm_to_vmem [thread:$0]  %s215, 1024, %s217, %s206, 64, 64, 4
        $region28: #{tpu_custom_call.1} parent=23 // pred_fallthru
          _
        // Predicated region
        $region29: #{tpu_custom_call.1} parent=23 // pred_check
          %p223 = pneg %p67
        $region30: #{tpu_custom_call.1} parent=23 // pred_check_branch
          %225 = sbr.rel (%p223) target = $region32
        $region31: #{tpu_custom_call.1} parent=23 // pred_region
          %s226 = sand.u32 %s21, 1
          %s227 = scalar_lea.sflag [#allocation6], %s226
          %s228 = sand.u32 %s57, 1
          %s229 = smul.addr %s228, 64
          %s230 = scalar_lea.vmem [#allocation5], %s229
          %s232 = ssub.s32 1024, 1024
          %233 = vsyncadd %s227, %s232
          %s234 = smul.addr %s21, 16
          %s235 = smul.addr %s234, 64
          %s236 = scalar_lea.hbm %s1, %s235
          %s237 = sshll.u32 %s230, 4
          %s238 = int_to_ptr.vmem [resolvable:$true] %s237
          %243 = dma.hbm_to_vmem [thread:$0]  %s236, 1024, %s238, %s227, 64, 64, 4
        $region32: #{tpu_custom_call.1} parent=23 // pred_fallthru
          _
        // Predicated region
        $region33: #{tpu_custom_call.1} parent=23 // pred_check
          %p244 = pneg %p93
        $region34: #{tpu_custom_call.1} parent=23 // pred_check_branch
          %246 = sbr.rel (%p244) target = $region36
        $region35: #{tpu_custom_call.1} parent=23 // pred_region
          %s247 = sand.u32 %s21, 1
          %s248 = scalar_lea.sflag [#allocation6], %s247
          %s249 = sand.u32 %s83, 1
          %s250 = smul.addr %s249, 8
          %s251 = scalar_lea.vmem [#allocation7], %s250
          %s253 = ssub.s32 128, 128
          %254 = vsyncadd %s248, %s253
          %s255 = smul.addr %s21, 128
          %s256 = scalar_lea.hbm %s2, %s255
          %s258 = sshll.u32 %s251, 4
          %s259 = int_to_ptr.vmem [resolvable:$true] %s258
          %261 = dma.hbm_to_vmem [thread:$0]  %s256, 128, %s259, %s248
        $region36: #{tpu_custom_call.1} parent=23 // pred_fallthru
          _
      $region24: #{tpu_custom_call.1} parent=5 // pred_fallthru
        _
      %p262 = scmp.le.s32.totalorder 1, %s21
      %p263 = scmp.lt.s32.totalorder %s21, 3
      %p264 = pnand %p262, %p263
      %p265 = pneg %p264
      // Predicated region
      $region37: #{tpu_custom_call.1} parent=5 // pred_check
        _
      $region38: #{tpu_custom_call.1} parent=5 // pred_check_branch
        %267 = sbr.rel (%p264) target = $region40
      $region39: #{tpu_custom_call.1} parent=5 // pred_region
        %s268 = ssub.s32 %s21, 1
        %s269 = sand.u32 %s34, 1
        %s270 = scalar_lea.sflag [#allocation3], %s269
        %s271 = sand.u32 %s34, 1
        %s272 = smul.addr %s271, 64
        %s273 = scalar_lea.vmem [#allocation2], %s272
        // Predicated region
        $region41: #{tpu_custom_call.1} parent=39 // pred_check
          %p274 = pneg %p47
        $region42: #{tpu_custom_call.1} parent=39 // pred_check_branch
          %276 = sbr.rel (%p274) target = $region44
        $region43: #{tpu_custom_call.1} parent=39 // pred_region
          %277 = dma.done %s270, 1024
        $region44: #{tpu_custom_call.1} parent=39 // pred_fallthru
          _
        %s278 = sand.u32 %s26, 1
        %s279 = scalar_lea.sflag [#allocation6], %s278
        %s280 = sand.u32 %s60, 1
        %s281 = smul.addr %s280, 64
        %s282 = scalar_lea.vmem [#allocation5], %s281
        // Predicated region
        $region45: #{tpu_custom_call.1} parent=39 // pred_check
          %p283 = pneg %p73
        $region46: #{tpu_custom_call.1} parent=39 // pred_check_branch
          %285 = sbr.rel (%p283) target = $region48
        $region47: #{tpu_custom_call.1} parent=39 // pred_region
          %286 = dma.done %s279, 1024
        $region48: #{tpu_custom_call.1} parent=39 // pred_fallthru
          _
        %s287 = sand.u32 %s26, 1
        %s288 = scalar_lea.sflag [#allocation6], %s287
        %s289 = sand.u32 %s86, 1
        %s290 = smul.addr %s289, 8
        %s291 = scalar_lea.vmem [#allocation7], %s290
        // Predicated region
        $region49: #{tpu_custom_call.1} parent=39 // pred_check
          %p292 = pneg %p99
        $region50: #{tpu_custom_call.1} parent=39 // pred_check_branch
          %294 = sbr.rel (%p292) target = $region52
        $region51: #{tpu_custom_call.1} parent=39 // pred_region
          %295 = dma.done %s288, 128
        $region52: #{tpu_custom_call.1} parent=39 // pred_fallthru
          _
        // Predicated region
        $region53: #{tpu_custom_call.1} parent=39 // pred_check
          %p296 = pneg %p120
        $region54: #{tpu_custom_call.1} parent=39 // pred_check_branch
          %298 = sbr.rel (%p296) target = $region56
        $region55: #{tpu_custom_call.1} parent=39 // pred_region
          %299 = dma.done [#allocation9], 6144
        $region56: #{tpu_custom_call.1} parent=39 // pred_fallthru
          _
        %s300 = sand.u32 %s34, 1
        %s301 = scalar_lea.sflag [#allocation3], %s300
        %s302 = sand.u32 %s34, 1
        %s303 = smul.addr %s302, 64
        %s304 = scalar_lea.vmem [#allocation2], %s303
        %p305 = pneg %p47
        %p306 = pneg %p44
        %s307 = sand.u32 %s26, 1
        %s308 = scalar_lea.sflag [#allocation6], %s307
        %s309 = sand.u32 %s60, 1
        %s310 = smul.addr %s309, 64
        %s311 = scalar_lea.vmem [#allocation5], %s310
        %p312 = pneg %p73
        %p313 = pneg %p70
        %s314 = sand.u32 %s26, 1
        %s315 = scalar_lea.sflag [#allocation6], %s314
        %s316 = sand.u32 %s86, 1
        %s317 = smul.addr %s316, 8
        %s318 = scalar_lea.vmem [#allocation7], %s317
        %p319 = pneg %p99
        %p320 = pneg %p96
        %p321 = pneg %p120
        %p322 = pneg %p117
        %p323 = pneg %p141
        %p324 = pneg %p138
        %p325 = pneg %p167
        %p326 = pneg %p164
        %s327 = sand.u32 %s154, 1
        %s328 = scalar_lea.sflag [#allocation4], %s327
        %s329 = sand.u32 %s154, 1
        %s330 = smul.addr %s329, 8
        %s331 = scalar_lea.vmem [#allocation10], %s330
        %v333 = vld [vmem:[%s273] sm:$0xf]
        %v334 = vld [vmem:[%s273 + $0x4] sm:$0xf]
        %v335 = vld [vmem:[%s273 + $0x8] sm:$0xf]
        %v336 = vld [vmem:[%s273 + $0xc] sm:$0xf]
        %v337 = vld [vmem:[%s273 + $0x10] sm:$0xf]
        %v338 = vld [vmem:[%s273 + $0x14] sm:$0xf]
        %v339 = vld [vmem:[%s273 + $0x18] sm:$0xf]
        %v340 = vld [vmem:[%s273 + $0x1c] sm:$0xf]
        %v341 = vld [vmem:[%s273 + $0x20] sm:$0xf]
        %v342 = vld [vmem:[%s273 + $0x24] sm:$0xf]
        %v343 = vld [vmem:[%s273 + $0x28] sm:$0xf]
        %v344 = vld [vmem:[%s273 + $0x2c] sm:$0xf]
        %v345 = vld [vmem:[%s273 + $0x30] sm:$0xf]
        %v346 = vld [vmem:[%s273 + $0x34] sm:$0xf]
        %v347 = vld [vmem:[%s273 + $0x38] sm:$0xf]
        %v348 = vld [vmem:[%s273 + $0x3c] sm:$0xf]
        %v349 = vld [vmem:[%s282] sm:$0xf]
        %v350 = vld [vmem:[%s282 + $0x4] sm:$0xf]
        %v351 = vld [vmem:[%s282 + $0x8] sm:$0xf]
        %v352 = vld [vmem:[%s282 + $0xc] sm:$0xf]
        %v353 = vld [vmem:[%s282 + $0x10] sm:$0xf]
        %v354 = vld [vmem:[%s282 + $0x14] sm:$0xf]
        %v355 = vld [vmem:[%s282 + $0x18] sm:$0xf]
        %v356 = vld [vmem:[%s282 + $0x1c] sm:$0xf]
        %v357 = vld [vmem:[%s282 + $0x20] sm:$0xf]
        %v358 = vld [vmem:[%s282 + $0x24] sm:$0xf]
        %v359 = vld [vmem:[%s282 + $0x28] sm:$0xf]
        %v360 = vld [vmem:[%s282 + $0x2c] sm:$0xf]
        %v361 = vld [vmem:[%s282 + $0x30] sm:$0xf]
        %v362 = vld [vmem:[%s282 + $0x34] sm:$0xf]
        %v363 = vld [vmem:[%s282 + $0x38] sm:$0xf]
        %v364 = vld [vmem:[%s282 + $0x3c] sm:$0xf]
        %v381 = vunpack.c.l.b16 %v333
        %v382 = vunpack.c.l.b16 %v334
        %v383 = vunpack.c.l.b16 %v335
        %v384 = vunpack.c.l.b16 %v336
        %v385 = vunpack.c.l.b16 %v337
        %v386 = vunpack.c.l.b16 %v338
        %v387 = vunpack.c.l.b16 %v339
        %v388 = vunpack.c.l.b16 %v340
        %v389 = vunpack.c.l.b16 %v341
        %v390 = vunpack.c.l.b16 %v342
        %v391 = vunpack.c.l.b16 %v343
        %v392 = vunpack.c.l.b16 %v344
        %v393 = vunpack.c.l.b16 %v345
        %v394 = vunpack.c.l.b16 %v346
        %v395 = vunpack.c.l.b16 %v347
        %v396 = vunpack.c.l.b16 %v348
        %v397 = vpack.c.b16 %v382, %v381
        %v398 = vpack.c.b16 %v384, %v383
        %v399 = vpack.c.b16 %v386, %v385
        %v400 = vpack.c.b16 %v388, %v387
        %v401 = vpack.c.b16 %v390, %v389
        %v402 = vpack.c.b16 %v392, %v391
        %v403 = vpack.c.b16 %v394, %v393
        %v404 = vpack.c.b16 %v396, %v395
        %v429 = vunpack.c.l.b16 %v349
        %v430 = vunpack.c.l.b16 %v350
        %v431 = vunpack.c.l.b16 %v351
        %v432 = vunpack.c.l.b16 %v352
        %v433 = vunpack.c.l.b16 %v353
        %v434 = vunpack.c.l.b16 %v354
        %v435 = vunpack.c.l.b16 %v355
        %v436 = vunpack.c.l.b16 %v356
        %v437 = vunpack.c.l.b16 %v357
        %v438 = vunpack.c.l.b16 %v358
        %v439 = vunpack.c.l.b16 %v359
        %v440 = vunpack.c.l.b16 %v360
        %v441 = vunpack.c.l.b16 %v361
        %v442 = vunpack.c.l.b16 %v362
        %v443 = vunpack.c.l.b16 %v363
        %v444 = vunpack.c.l.b16 %v364
        %v445 = vpack.c.b16 %v430, %v429
        %v446 = vpack.c.b16 %v432, %v431
        %v447 = vpack.c.b16 %v434, %v433
        %v448 = vpack.c.b16 %v436, %v435
        %v449 = vpack.c.b16 %v438, %v437
        %v450 = vpack.c.b16 %v440, %v439
        %v451 = vpack.c.b16 %v442, %v441
        %v452 = vpack.c.b16 %v444, %v443
        %461 = vmatprep.subr.bf16.mxu0 0
        %462 = vmatpush1.bf16.msra.mxu0 %v445
        %463 = vmatprep.subr.bf16.mxu0 0
        %464 = vmatpush1.bf16.msra.mxu0 %v446
        %465 = vmatprep.subr.bf16.mxu0 0
        %466 = vmatpush1.bf16.msra.mxu0 %v447
        %467 = vmatprep.subr.bf16.mxu0 0
        %468 = vmatpush1.bf16.msra.mxu0 %v448
        %469 = vmatprep.subr.bf16.mxu0 0
        %470 = vmatpush1.bf16.msra.mxu0 %v449
        %471 = vmatprep.subr.bf16.mxu0 0
        %472 = vmatpush1.bf16.msra.mxu0 %v450
        %473 = vmatprep.subr.bf16.mxu0 0
        %474 = vmatpush1.bf16.msra.mxu0 %v451
        %475 = vmatprep.subr.bf16.mxu0 0
        %476 = vmatpush1.bf16.msra.mxu0 %v452
        %477 = vmatprep.subr.bf16.mxu0 0
        %478 = vmatpush1.bf16.msra.mxu0 0
        %479 = vmatprep.subr.bf16.mxu0 0
        %480 = vmatpush1.bf16.msra.mxu0 0
        %481 = vmatprep.subr.bf16.mxu0 0
        %482 = vmatpush1.bf16.msra.mxu0 0
        %483 = vmatprep.subr.bf16.mxu0 0
        %484 = vmatpush1.bf16.msra.mxu0 0
        %485 = vmatprep.subr.bf16.mxu0 0
        %486 = vmatpush1.bf16.msra.mxu0 0
        %487 = vmatprep.subr.bf16.mxu0 0
        %488 = vmatpush1.bf16.msra.mxu0 0
        %489 = vmatprep.subr.bf16.mxu0 0
        %490 = vmatpush1.bf16.msra.mxu0 0
        %491 = vmatprep.subr.bf16.mxu0 0
        %492 = vmatpush1.bf16.msra.mxu0 0
        %493 = vmatprep.mubr.bf16.mxu0 0
        %494 = vmatmul.mubr.bf16.gmra.mrb[0].mxu0 %v397
        %v495 = vpop.f32.mrb[0].mxu0
        %v496 = vadd.f32 0.0, %v495
        %v497 = vpop.f32.mrb[0].mxu0
        %v498 = vpop.f32.mrb[0].mxu0
        %v499 = vadd.f32 0.0, %v498
        %v500 = vpop.f32.mrb[0].mxu0
        %501 = vmatprep.mubr.bf16.mxu0 0
        %502 = vmatmul.mubr.bf16.gmra.mrb[0].mxu0 %v398
        %v503 = vpop.f32.mrb[0].mxu0
        %v504 = vadd.f32 0.0, %v503
        %v505 = vpop.f32.mrb[0].mxu0
        %v506 = vpop.f32.mrb[0].mxu0
        %v507 = vadd.f32 0.0, %v506
        %v508 = vpop.f32.mrb[0].mxu0
        %509 = vmatprep.mubr.bf16.mxu0 0
        %510 = vmatmul.mubr.bf16.gmra.mrb[0].mxu0 %v399
        %v511 = vpop.f32.mrb[0].mxu0
        %v512 = vadd.f32 0.0, %v511
        %v513 = vpop.f32.mrb[0].mxu0
        %v514 = vpop.f32.mrb[0].mxu0
        %v515 = vadd.f32 0.0, %v514
        %v516 = vpop.f32.mrb[0].mxu0
        %517 = vmatprep.mubr.bf16.mxu0 0
        %518 = vmatmul.mubr.bf16.gmra.mrb[0].mxu0 %v400
        %v519 = vpop.f32.mrb[0].mxu0
        %v520 = vadd.f32 0.0, %v519
        %v521 = vpop.f32.mrb[0].mxu0
        %v522 = vpop.f32.mrb[0].mxu0
        %v523 = vadd.f32 0.0, %v522
        %v524 = vpop.f32.mrb[0].mxu0
        %525 = vmatprep.mubr.bf16.mxu0 0
        %526 = vmatmul.mubr.bf16.gmra.mrb[0].mxu0 %v401
        %v527 = vpop.f32.mrb[0].mxu0
        %v528 = vadd.f32 0.0, %v527
        %v529 = vpop.f32.mrb[0].mxu0
        %v530 = vpop.f32.mrb[0].mxu0
        %v531 = vadd.f32 0.0, %v530
        %v532 = vpop.f32.mrb[0].mxu0
        %533 = vmatprep.mubr.bf16.mxu0 0
        %534 = vmatmul.mubr.bf16.gmra.mrb[0].mxu0 %v402
        %v535 = vpop.f32.mrb[0].mxu0
        %v536 = vadd.f32 0.0, %v535
        %v537 = vpop.f32.mrb[0].mxu0
        %v538 = vpop.f32.mrb[0].mxu0
        %v539 = vadd.f32 0.0, %v538
        %v540 = vpop.f32.mrb[0].mxu0
        %541 = vmatprep.mubr.bf16.mxu0 0
        %542 = vmatmul.mubr.bf16.gmra.mrb[0].mxu0 %v403
        %v543 = vpop.f32.mrb[0].mxu0
        %v544 = vadd.f32 0.0, %v543
        %v545 = vpop.f32.mrb[0].mxu0
        %v546 = vpop.f32.mrb[0].mxu0
        %v547 = vadd.f32 0.0, %v546
        %v548 = vpop.f32.mrb[0].mxu0
        %549 = vmatprep.mubr.bf16.mxu0 0
        %550 = vmatmul.mubr.bf16.gmra.mrb[0].mxu0 %v404
        %v551 = vpop.f32.mrb[0].mxu0
        %v552 = vadd.f32 0.0, %v551
        %v553 = vpop.f32.mrb[0].mxu0
        %v554 = vpop.f32.mrb[0].mxu0
        %v555 = vadd.f32 0.0, %v554
        %v556 = vpop.f32.mrb[0].mxu0
        %557 = vdwg.mxu0
        %v558 = vpack.c.bf16 %v499, %v496
        %v559 = vpack.c.bf16 %v507, %v504
        %v560 = vpack.c.bf16 %v515, %v512
        %v561 = vpack.c.bf16 %v523, %v520
        %v562 = vpack.c.bf16 %v531, %v528
        %v563 = vpack.c.bf16 %v539, %v536
        %v564 = vpack.c.bf16 %v547, %v544
        %v565 = vpack.c.bf16 %v555, %v552
        %v566 = vld [vmem:[#allocation8] sm:$0xf]
        %v567 = vld [vmem:[#allocation8 + $0x4] sm:$0xf]
        %v568 = vld [vmem:[#allocation8 + $0x8] sm:$0xf]
        %v569 = vld [vmem:[#allocation8 + $0xc] sm:$0xf]
        %v570 = vld [vmem:[#allocation8 + $0x10] sm:$0xf]
        %v571 = vld [vmem:[#allocation8 + $0x14] sm:$0xf]
        %v572 = vld [vmem:[#allocation8 + $0x18] sm:$0xf]
        %v573 = vld [vmem:[#allocation8 + $0x1c] sm:$0xf]
        %v574 = vld [vmem:[#allocation8 + $0x20] sm:$0xf]
        %v575 = vld [vmem:[#allocation8 + $0x24] sm:$0xf]
        %v576 = vld [vmem:[#allocation8 + $0x28] sm:$0xf]
        %v577 = vld [vmem:[#allocation8 + $0x2c] sm:$0xf]
        %v578 = vld [vmem:[#allocation8 + $0x30] sm:$0xf]
        %v579 = vld [vmem:[#allocation8 + $0x34] sm:$0xf]
        %v580 = vld [vmem:[#allocation8 + $0x38] sm:$0xf]
        %v581 = vld [vmem:[#allocation8 + $0x3c] sm:$0xf]
        %v582 = vld [vmem:[%s4] sm:$0x1]
        %v583 = vlaneseq
        %v584 = vshrl.u32 %v583, 7
        %v585 = vsub.s32 0, %v584
        %v586 = vrot.slane %v582, %v585
        %v603 = vunpack.c.l.b16 %v566
        %v604 = vunpack.c.l.b16 %v567
        %v605 = vunpack.c.l.b16 %v568
        %v606 = vunpack.c.l.b16 %v569
        %v607 = vunpack.c.l.b16 %v570
        %v608 = vunpack.c.l.b16 %v571
        %v609 = vunpack.c.l.b16 %v572
        %v610 = vunpack.c.l.b16 %v573
        %v611 = vunpack.c.l.b16 %v574
        %v612 = vunpack.c.l.b16 %v575
        %v613 = vunpack.c.l.b16 %v576
        %v614 = vunpack.c.l.b16 %v577
        %v615 = vunpack.c.l.b16 %v578
        %v616 = vunpack.c.l.b16 %v579
        %v617 = vunpack.c.l.b16 %v580
        %v618 = vunpack.c.l.b16 %v581
        %v619 = vpack.c.b16 %v604, %v603
        %v620 = vpack.c.b16 %v606, %v605
        %v621 = vpack.c.b16 %v608, %v607
        %v622 = vpack.c.b16 %v610, %v609
        %v623 = vpack.c.b16 %v612, %v611
        %v624 = vpack.c.b16 %v614, %v613
        %v625 = vpack.c.b16 %v616, %v615
        %v626 = vpack.c.b16 %v618, %v617
        %635 = vmatprep.subr.bf16.mxu0 0
        %636 = vmatpush1.bf16.msra.mxu0 %v619
        %637 = vmatprep.subr.bf16.mxu0 0
        %638 = vmatpush1.bf16.msra.mxu0 %v620
        %639 = vmatprep.subr.bf16.mxu0 0
        %640 = vmatpush1.bf16.msra.mxu0 %v621
        %641 = vmatprep.subr.bf16.mxu0 0
        %642 = vmatpush1.bf16.msra.mxu0 %v622
        %643 = vmatprep.subr.bf16.mxu0 0
        %644 = vmatpush1.bf16.msra.mxu0 %v623
        %645 = vmatprep.subr.bf16.mxu0 0
        %646 = vmatpush1.bf16.msra.mxu0 %v624
        %647 = vmatprep.subr.bf16.mxu0 0
        %648 = vmatpush1.bf16.msra.mxu0 %v625
        %649 = vmatprep.subr.bf16.mxu0 0
        %650 = vmatpush1.bf16.msra.mxu0 %v626
        %651 = vmatprep.subr.bf16.mxu0 0
        %652 = vmatpush1.bf16.msra.mxu0 0
        %653 = vmatprep.subr.bf16.mxu0 0
        %654 = vmatpush1.bf16.msra.mxu0 0
        %655 = vmatprep.subr.bf16.mxu0 0
        %656 = vmatpush1.bf16.msra.mxu0 0
        %657 = vmatprep.subr.bf16.mxu0 0
        %658 = vmatpush1.bf16.msra.mxu0 0
        %659 = vmatprep.subr.bf16.mxu0 0
        %660 = vmatpush1.bf16.msra.mxu0 0
        %661 = vmatprep.subr.bf16.mxu0 0
        %662 = vmatpush1.bf16.msra.mxu0 0
        %663 = vmatprep.subr.bf16.mxu0 0
        %664 = vmatpush1.bf16.msra.mxu0 0
        %665 = vmatprep.subr.bf16.mxu0 0
        %666 = vmatpush1.bf16.msra.mxu0 0
        %667 = vmatprep.mubr.bf16.mxu0 0
        %668 = vmatmul.mubr.bf16.gmra.mrb[0].mxu0 %v558
        %v669 = vpop.f32.mrb[0].mxu0
        %v670 = vadd.f32 %v586, %v669
        %v671 = vpop.f32.mrb[0].mxu0
        %v672 = vpop.f32.mrb[0].mxu0
        %v673 = vadd.f32 %v586, %v672
        %v674 = vpop.f32.mrb[0].mxu0
        %675 = vmatprep.mubr.bf16.mxu0 0
        %676 = vmatmul.mubr.bf16.gmra.mrb[0].mxu0 %v559
        %v677 = vpop.f32.mrb[0].mxu0
        %v678 = vadd.f32 %v586, %v677
        %v679 = vpop.f32.mrb[0].mxu0
        %v680 = vpop.f32.mrb[0].mxu0
        %v681 = vadd.f32 %v586, %v680
        %v682 = vpop.f32.mrb[0].mxu0
        %683 = vmatprep.mubr.bf16.mxu0 0
        %684 = vmatmul.mubr.bf16.gmra.mrb[0].mxu0 %v560
        %v685 = vpop.f32.mrb[0].mxu0
        %v686 = vadd.f32 %v586, %v685
        %v687 = vpop.f32.mrb[0].mxu0
        %v688 = vpop.f32.mrb[0].mxu0
        %v689 = vadd.f32 %v586, %v688
        %v690 = vpop.f32.mrb[0].mxu0
        %691 = vmatprep.mubr.bf16.mxu0 0
        %692 = vmatmul.mubr.bf16.gmra.mrb[0].mxu0 %v561
        %v693 = vpop.f32.mrb[0].mxu0
        %v694 = vadd.f32 %v586, %v693
        %v695 = vpop.f32.mrb[0].mxu0
        %v696 = vpop.f32.mrb[0].mxu0
        %v697 = vadd.f32 %v586, %v696
        %v698 = vpop.f32.mrb[0].mxu0
        %699 = vmatprep.mubr.bf16.mxu0 0
        %700 = vmatmul.mubr.bf16.gmra.mrb[0].mxu0 %v562
        %v701 = vpop.f32.mrb[0].mxu0
        %v702 = vadd.f32 %v586, %v701
        %v703 = vpop.f32.mrb[0].mxu0
        %v704 = vpop.f32.mrb[0].mxu0
        %v705 = vadd.f32 %v586, %v704
        %v706 = vpop.f32.mrb[0].mxu0
        %707 = vmatprep.mubr.bf16.mxu0 0
        %708 = vmatmul.mubr.bf16.gmra.mrb[0].mxu0 %v563
        %v709 = vpop.f32.mrb[0].mxu0
        %v710 = vadd.f32 %v586, %v709
        %v711 = vpop.f32.mrb[0].mxu0
        %v712 = vpop.f32.mrb[0].mxu0
        %v713 = vadd.f32 %v586, %v712
        %v714 = vpop.f32.mrb[0].mxu0
        %715 = vmatprep.mubr.bf16.mxu0 0
        %716 = vmatmul.mubr.bf16.gmra.mrb[0].mxu0 %v564
        %v717 = vpop.f32.mrb[0].mxu0
        %v718 = vadd.f32 %v586, %v717
        %v719 = vpop.f32.mrb[0].mxu0
        %v720 = vpop.f32.mrb[0].mxu0
        %v721 = vadd.f32 %v586, %v720
        %v722 = vpop.f32.mrb[0].mxu0
        %723 = vmatprep.mubr.bf16.mxu0 0
        %724 = vmatmul.mubr.bf16.gmra.mrb[0].mxu0 %v565
        %v725 = vpop.f32.mrb[0].mxu0
        %v726 = vadd.f32 %v586, %v725
        %v727 = vpop.f32.mrb[0].mxu0
        %v728 = vpop.f32.mrb[0].mxu0
        %v729 = vadd.f32 %v586, %v728
        %v730 = vpop.f32.mrb[0].mxu0
        %731 = vdwg.mxu0
        %v732 = vmax.f32 %v670, 0.0
        %v733 = vmax.f32 %v673, 0.0
        %v734 = vmax.f32 %v678, 0.0
        %v735 = vmax.f32 %v681, 0.0
        %v736 = vmax.f32 %v686, 0.0
        %v737 = vmax.f32 %v689, 0.0
        %v738 = vmax.f32 %v694, 0.0
        %v739 = vmax.f32 %v697, 0.0
        %v740 = vmax.f32 %v702, 0.0
        %v741 = vmax.f32 %v705, 0.0
        %v742 = vmax.f32 %v710, 0.0
        %v743 = vmax.f32 %v713, 0.0
        %v744 = vmax.f32 %v718, 0.0
        %v745 = vmax.f32 %v721, 0.0
        %v746 = vmax.f32 %v726, 0.0
        %v747 = vmax.f32 %v729, 0.0
        %v748 = vpack.c.bf16 %v733, %v732
        %v749 = vpack.c.bf16 %v735, %v734
        %v750 = vpack.c.bf16 %v737, %v736
        %v751 = vpack.c.bf16 %v739, %v738
        %v752 = vpack.c.bf16 %v741, %v740
        %v753 = vpack.c.bf16 %v743, %v742
        %v754 = vpack.c.bf16 %v745, %v744
        %v755 = vpack.c.bf16 %v747, %v746
        %756 = vmatprep.subr.bf16.mxu0 0
        %757 = vmatpush1.bf16.msra.mxu0 %v748
        %758 = vmatprep.subr.bf16.mxu0 0
        %759 = vmatpush1.bf16.msra.mxu0 %v749
        %760 = vmatprep.subr.bf16.mxu0 0
        %761 = vmatpush1.bf16.msra.mxu0 %v750
        %762 = vmatprep.subr.bf16.mxu0 0
        %763 = vmatpush1.bf16.msra.mxu0 %v751
        %764 = vmatprep.subr.bf16.mxu0 0
        %765 = vmatpush1.bf16.msra.mxu0 %v752
        %766 = vmatprep.subr.bf16.mxu0 0
        %767 = vmatpush1.bf16.msra.mxu0 %v753
        %768 = vmatprep.subr.bf16.mxu0 0
        %769 = vmatpush1.bf16.msra.mxu0 %v754
        %770 = vmatprep.subr.bf16.mxu0 0
        %771 = vmatpush1.bf16.msra.mxu0 %v755
        %772 = vmatprep.subr.bf16.mxu0 0
        %773 = vmatpush1.bf16.msra.mxu0 0
        %774 = vmatprep.subr.bf16.mxu0 0
        %775 = vmatpush1.bf16.msra.mxu0 0
        %776 = vmatprep.subr.bf16.mxu0 0
        %777 = vmatpush1.bf16.msra.mxu0 0
        %778 = vmatprep.subr.bf16.mxu0 0
        %779 = vmatpush1.bf16.msra.mxu0 0
        %780 = vmatprep.subr.bf16.mxu0 0
        %781 = vmatpush1.bf16.msra.mxu0 0
        %782 = vmatprep.subr.bf16.mxu0 0
        %783 = vmatpush1.bf16.msra.mxu0 0
        %784 = vmatprep.subr.bf16.mxu0 0
        %785 = vmatpush1.bf16.msra.mxu0 0
        %786 = vmatprep.subr.bf16.mxu0 0
        %787 = vmatpush1.bf16.msra.mxu0 0
        %788 = vmatprep.mubr.bf16.mxu0 0
        %789 = vmatmul.mubr.bf16.gmra.mrb[0].mxu0 %v397
        %v790 = vpop.f32.mrb[0].mxu0
        %v791 = vadd.f32 0.0, %v790
        %v792 = vpop.f32.mrb[0].mxu0
        %v793 = vpop.f32.mrb[0].mxu0
        %v794 = vadd.f32 0.0, %v793
        %v795 = vpop.f32.mrb[0].mxu0
        %796 = vmatprep.mubr.bf16.mxu0 0
        %797 = vmatmul.mubr.bf16.gmra.mrb[0].mxu0 %v398
        %v798 = vpop.f32.mrb[0].mxu0
        %v799 = vadd.f32 0.0, %v798
        %v800 = vpop.f32.mrb[0].mxu0
        %v801 = vpop.f32.mrb[0].mxu0
        %v802 = vadd.f32 0.0, %v801
        %v803 = vpop.f32.mrb[0].mxu0
        %804 = vmatprep.mubr.bf16.mxu0 0
        %805 = vmatmul.mubr.bf16.gmra.mrb[0].mxu0 %v399
        %v806 = vpop.f32.mrb[0].mxu0
        %v807 = vadd.f32 0.0, %v806
        %v808 = vpop.f32.mrb[0].mxu0
        %v809 = vpop.f32.mrb[0].mxu0
        %v810 = vadd.f32 0.0, %v809
        %v811 = vpop.f32.mrb[0].mxu0
        %812 = vmatprep.mubr.bf16.mxu0 0
        %813 = vmatmul.mubr.bf16.gmra.mrb[0].mxu0 %v400
        %v814 = vpop.f32.mrb[0].mxu0
        %v815 = vadd.f32 0.0, %v814
        %v816 = vpop.f32.mrb[0].mxu0
        %v817 = vpop.f32.mrb[0].mxu0
        %v818 = vadd.f32 0.0, %v817
        %v819 = vpop.f32.mrb[0].mxu0
        %820 = vmatprep.mubr.bf16.mxu0 0
        %821 = vmatmul.mubr.bf16.gmra.mrb[0].mxu0 %v401
        %v822 = vpop.f32.mrb[0].mxu0
        %v823 = vadd.f32 0.0, %v822
        %v824 = vpop.f32.mrb[0].mxu0
        %v825 = vpop.f32.mrb[0].mxu0
        %v826 = vadd.f32 0.0, %v825
        %v827 = vpop.f32.mrb[0].mxu0
        %828 = vmatprep.mubr.bf16.mxu0 0
        %829 = vmatmul.mubr.bf16.gmra.mrb[0].mxu0 %v402
        %v830 = vpop.f32.mrb[0].mxu0
        %v831 = vadd.f32 0.0, %v830
        %v832 = vpop.f32.mrb[0].mxu0
        %v833 = vpop.f32.mrb[0].mxu0
        %v834 = vadd.f32 0.0, %v833
        %v835 = vpop.f32.mrb[0].mxu0
        %836 = vmatprep.mubr.bf16.mxu0 0
        %837 = vmatmul.mubr.bf16.gmra.mrb[0].mxu0 %v403
        %v838 = vpop.f32.mrb[0].mxu0
        %v839 = vadd.f32 0.0, %v838
        %v840 = vpop.f32.mrb[0].mxu0
        %v841 = vpop.f32.mrb[0].mxu0
        %v842 = vadd.f32 0.0, %v841
        %v843 = vpop.f32.mrb[0].mxu0
        %844 = vmatprep.mubr.bf16.mxu0 0
        %845 = vmatmul.mubr.bf16.gmra.mrb[0].mxu0 %v404
        %v846 = vpop.f32.mrb[0].mxu0
        %v847 = vadd.f32 0.0, %v846
        %v848 = vpop.f32.mrb[0].mxu0
        %v849 = vpop.f32.mrb[0].mxu0
        %v850 = vadd.f32 0.0, %v849
        %v851 = vpop.f32.mrb[0].mxu0
        %852 = vdwg.mxu0
        %v853 = vpack.c.bf16 %v794, %v791
        %v854 = vpack.c.bf16 %v802, %v799
        %v855 = vpack.c.bf16 %v810, %v807
        %v856 = vpack.c.bf16 %v818, %v815
        %v857 = vpack.c.bf16 %v826, %v823
        %v858 = vpack.c.bf16 %v834, %v831
        %v859 = vpack.c.bf16 %v842, %v839
        %v860 = vpack.c.bf16 %v850, %v847
        %s861 = scalar_lea.vmem [#allocation8], 64
        %v862 = vld [vmem:[%s861] sm:$0xf]
        %v863 = vld [vmem:[%s861 + $0x4] sm:$0xf]
        %v864 = vld [vmem:[%s861 + $0x8] sm:$0xf]
        %v865 = vld [vmem:[%s861 + $0xc] sm:$0xf]
        %v866 = vld [vmem:[%s861 + $0x10] sm:$0xf]
        %v867 = vld [vmem:[%s861 + $0x14] sm:$0xf]
        %v868 = vld [vmem:[%s861 + $0x18] sm:$0xf]
        %v869 = vld [vmem:[%s861 + $0x1c] sm:$0xf]
        %v870 = vld [vmem:[%s861 + $0x20] sm:$0xf]
        %v871 = vld [vmem:[%s861 + $0x24] sm:$0xf]
        %v872 = vld [vmem:[%s861 + $0x28] sm:$0xf]
        %v873 = vld [vmem:[%s861 + $0x2c] sm:$0xf]
        %v874 = vld [vmem:[%s861 + $0x30] sm:$0xf]
        %v875 = vld [vmem:[%s861 + $0x34] sm:$0xf]
        %v876 = vld [vmem:[%s861 + $0x38] sm:$0xf]
        %v877 = vld [vmem:[%s861 + $0x3c] sm:$0xf]
        %v878 = vld [vmem:[%s4 + $0x1] sm:$0x1]
        %v879 = vlaneseq
        %v880 = vshrl.u32 %v879, 7
        %v881 = vsub.s32 0, %v880
        %v882 = vrot.slane %v878, %v881
        %v899 = vunpack.c.l.b16 %v862
        %v900 = vunpack.c.l.b16 %v863
        %v901 = vunpack.c.l.b16 %v864
        %v902 = vunpack.c.l.b16 %v865
        %v903 = vunpack.c.l.b16 %v866
        %v904 = vunpack.c.l.b16 %v867
        %v905 = vunpack.c.l.b16 %v868
        %v906 = vunpack.c.l.b16 %v869
        %v907 = vunpack.c.l.b16 %v870
        %v908 = vunpack.c.l.b16 %v871
        %v909 = vunpack.c.l.b16 %v872
        %v910 = vunpack.c.l.b16 %v873
        %v911 = vunpack.c.l.b16 %v874
        %v912 = vunpack.c.l.b16 %v875
        %v913 = vunpack.c.l.b16 %v876
        %v914 = vunpack.c.l.b16 %v877
        %v915 = vpack.c.b16 %v900, %v899
        %v916 = vpack.c.b16 %v902, %v901
        %v917 = vpack.c.b16 %v904, %v903
        %v918 = vpack.c.b16 %v906, %v905
        %v919 = vpack.c.b16 %v908, %v907
        %v920 = vpack.c.b16 %v910, %v909
        %v921 = vpack.c.b16 %v912, %v911
        %v922 = vpack.c.b16 %v914, %v913
        %931 = vmatprep.subr.bf16.mxu0 0
        %932 = vmatpush1.bf16.msra.mxu0 %v915
        %933 = vmatprep.subr.bf16.mxu0 0
        %934 = vmatpush1.bf16.msra.mxu0 %v916
        %935 = vmatprep.subr.bf16.mxu0 0
        %936 = vmatpush1.bf16.msra.mxu0 %v917
        %937 = vmatprep.subr.bf16.mxu0 0
        %938 = vmatpush1.bf16.msra.mxu0 %v918
        %939 = vmatprep.subr.bf16.mxu0 0
        %940 = vmatpush1.bf16.msra.mxu0 %v919
        %941 = vmatprep.subr.bf16.mxu0 0
        %942 = vmatpush1.bf16.msra.mxu0 %v920
        %943 = vmatprep.subr.bf16.mxu0 0
        %944 = vmatpush1.bf16.msra.mxu0 %v921
        %945 = vmatprep.subr.bf16.mxu0 0
        %946 = vmatpush1.bf16.msra.mxu0 %v922
        %947 = vmatprep.subr.bf16.mxu0 0
        %948 = vmatpush1.bf16.msra.mxu0 0
        %949 = vmatprep.subr.bf16.mxu0 0
        %950 = vmatpush1.bf16.msra.mxu0 0
        %951 = vmatprep.subr.bf16.mxu0 0
        %952 = vmatpush1.bf16.msra.mxu0 0
        %953 = vmatprep.subr.bf16.mxu0 0
        %954 = vmatpush1.bf16.msra.mxu0 0
        %955 = vmatprep.subr.bf16.mxu0 0
        %956 = vmatpush1.bf16.msra.mxu0 0
        %957 = vmatprep.subr.bf16.mxu0 0
        %958 = vmatpush1.bf16.msra.mxu0 0
        %959 = vmatprep.subr.bf16.mxu0 0
        %960 = vmatpush1.bf16.msra.mxu0 0
        %961 = vmatprep.subr.bf16.mxu0 0
        %962 = vmatpush1.bf16.msra.mxu0 0
        %963 = vmatprep.mubr.bf16.mxu0 0
        %964 = vmatmul.mubr.bf16.gmra.mrb[0].mxu0 %v853
        %v965 = vpop.f32.mrb[0].mxu0
        %v966 = vadd.f32 %v882, %v965
        %v967 = vpop.f32.mrb[0].mxu0
        %v968 = vpop.f32.mrb[0].mxu0
        %v969 = vadd.f32 %v882, %v968
        %v970 = vpop.f32.mrb[0].mxu0
        %971 = vmatprep.mubr.bf16.mxu0 0
        %972 = vmatmul.mubr.bf16.gmra.mrb[0].mxu0 %v854
        %v973 = vpop.f32.mrb[0].mxu0
        %v974 = vadd.f32 %v882, %v973
        %v975 = vpop.f32.mrb[0].mxu0
        %v976 = vpop.f32.mrb[0].mxu0
        %v977 = vadd.f32 %v882, %v976
        %v978 = vpop.f32.mrb[0].mxu0
        %979 = vmatprep.mubr.bf16.mxu0 0
        %980 = vmatmul.mubr.bf16.gmra.mrb[0].mxu0 %v855
        %v981 = vpop.f32.mrb[0].mxu0
        %v982 = vadd.f32 %v882, %v981
        %v983 = vpop.f32.mrb[0].mxu0
        %v984 = vpop.f32.mrb[0].mxu0
        %v985 = vadd.f32 %v882, %v984
        %v986 = vpop.f32.mrb[0].mxu0
        %987 = vmatprep.mubr.bf16.mxu0 0
        %988 = vmatmul.mubr.bf16.gmra.mrb[0].mxu0 %v856
        %v989 = vpop.f32.mrb[0].mxu0
        %v990 = vadd.f32 %v882, %v989
        %v991 = vpop.f32.mrb[0].mxu0
        %v992 = vpop.f32.mrb[0].mxu0
        %v993 = vadd.f32 %v882, %v992
        %v994 = vpop.f32.mrb[0].mxu0
        %995 = vmatprep.mubr.bf16.mxu0 0
        %996 = vmatmul.mubr.bf16.gmra.mrb[0].mxu0 %v857
        %v997 = vpop.f32.mrb[0].mxu0
        %v998 = vadd.f32 %v882, %v997
        %v999 = vpop.f32.mrb[0].mxu0
        %v1000 = vpop.f32.mrb[0].mxu0
        %v1001 = vadd.f32 %v882, %v1000
        %v1002 = vpop.f32.mrb[0].mxu0
        %1003 = vmatprep.mubr.bf16.mxu0 0
        %1004 = vmatmul.mubr.bf16.gmra.mrb[0].mxu0 %v858
        %v1005 = vpop.f32.mrb[0].mxu0
        %v1006 = vadd.f32 %v882, %v1005
        %v1007 = vpop.f32.mrb[0].mxu0
        %v1008 = vpop.f32.mrb[0].mxu0
        %v1009 = vadd.f32 %v882, %v1008
        %v1010 = vpop.f32.mrb[0].mxu0
        %1011 = vmatprep.mubr.bf16.mxu0 0
        %1012 = vmatmul.mubr.bf16.gmra.mrb[0].mxu0 %v859
        %v1013 = vpop.f32.mrb[0].mxu0
        %v1014 = vadd.f32 %v882, %v1013
        %v1015 = vpop.f32.mrb[0].mxu0
        %v1016 = vpop.f32.mrb[0].mxu0
        %v1017 = vadd.f32 %v882, %v1016
        %v1018 = vpop.f32.mrb[0].mxu0
        %1019 = vmatprep.mubr.bf16.mxu0 0
        %1020 = vmatmul.mubr.bf16.gmra.mrb[0].mxu0 %v860
        %v1021 = vpop.f32.mrb[0].mxu0
        %v1022 = vadd.f32 %v882, %v1021
        %v1023 = vpop.f32.mrb[0].mxu0
        %v1024 = vpop.f32.mrb[0].mxu0
        %v1025 = vadd.f32 %v882, %v1024
        %v1026 = vpop.f32.mrb[0].mxu0
        %1027 = vdwg.mxu0
        %v1028 = vmax.f32 %v966, 0.0
        %v1029 = vmax.f32 %v969, 0.0
        %v1030 = vmax.f32 %v974, 0.0
        %v1031 = vmax.f32 %v977, 0.0
        %v1032 = vmax.f32 %v982, 0.0
        %v1033 = vmax.f32 %v985, 0.0
        %v1034 = vmax.f32 %v990, 0.0
        %v1035 = vmax.f32 %v993, 0.0
        %v1036 = vmax.f32 %v998, 0.0
        %v1037 = vmax.f32 %v1001, 0.0
        %v1038 = vmax.f32 %v1006, 0.0
        %v1039 = vmax.f32 %v1009, 0.0
        %v1040 = vmax.f32 %v1014, 0.0
        %v1041 = vmax.f32 %v1017, 0.0
        %v1042 = vmax.f32 %v1022, 0.0
        %v1043 = vmax.f32 %v1025, 0.0
        %v1044 = vpack.c.bf16 %v1029, %v1028
        %v1045 = vpack.c.bf16 %v1031, %v1030
        %v1046 = vpack.c.bf16 %v1033, %v1032
        %v1047 = vpack.c.bf16 %v1035, %v1034
        %v1048 = vpack.c.bf16 %v1037, %v1036
        %v1049 = vpack.c.bf16 %v1039, %v1038
        %v1050 = vpack.c.bf16 %v1041, %v1040
        %v1051 = vpack.c.bf16 %v1043, %v1042
        %1052 = vmatprep.subr.bf16.mxu0 0
        %1053 = vmatpush1.bf16.msra.mxu0 %v1044
        %1054 = vmatprep.subr.bf16.mxu0 0
        %1055 = vmatpush1.bf16.msra.mxu0 %v1045
        %1056 = vmatprep.subr.bf16.mxu0 0
        %1057 = vmatpush1.bf16.msra.mxu0 %v1046
        %1058 = vmatprep.subr.bf16.mxu0 0
        %1059 = vmatpush1.bf16.msra.mxu0 %v1047
        %1060 = vmatprep.subr.bf16.mxu0 0
        %1061 = vmatpush1.bf16.msra.mxu0 %v1048
        %1062 = vmatprep.subr.bf16.mxu0 0
        %1063 = vmatpush1.bf16.msra.mxu0 %v1049
        %1064 = vmatprep.subr.bf16.mxu0 0
        %1065 = vmatpush1.bf16.msra.mxu0 %v1050
        %1066 = vmatprep.subr.bf16.mxu0 0
        %1067 = vmatpush1.bf16.msra.mxu0 %v1051
        %1068 = vmatprep.subr.bf16.mxu0 0
        %1069 = vmatpush1.bf16.msra.mxu0 0
        %1070 = vmatprep.subr.bf16.mxu0 0
        %1071 = vmatpush1.bf16.msra.mxu0 0
        %1072 = vmatprep.subr.bf16.mxu0 0
        %1073 = vmatpush1.bf16.msra.mxu0 0
        %1074 = vmatprep.subr.bf16.mxu0 0
        %1075 = vmatpush1.bf16.msra.mxu0 0
        %1076 = vmatprep.subr.bf16.mxu0 0
        %1077 = vmatpush1.bf16.msra.mxu0 0
        %1078 = vmatprep.subr.bf16.mxu0 0
        %1079 = vmatpush1.bf16.msra.mxu0 0
        %1080 = vmatprep.subr.bf16.mxu0 0
        %1081 = vmatpush1.bf16.msra.mxu0 0
        %1082 = vmatprep.subr.bf16.mxu0 0
        %1083 = vmatpush1.bf16.msra.mxu0 0
        %1084 = vmatprep.mubr.bf16.mxu0 0
        %1085 = vmatmul.mubr.bf16.gmra.mrb[0].mxu0 %v397
        %v1086 = vpop.f32.mrb[0].mxu0
        %v1087 = vadd.f32 0.0, %v1086
        %v1088 = vpop.f32.mrb[0].mxu0
        %v1089 = vpop.f32.mrb[0].mxu0
        %v1090 = vadd.f32 0.0, %v1089
        %v1091 = vpop.f32.mrb[0].mxu0
        %1092 = vmatprep.mubr.bf16.mxu0 0
        %1093 = vmatmul.mubr.bf16.gmra.mrb[0].mxu0 %v398
        %v1094 = vpop.f32.mrb[0].mxu0
        %v1095 = vadd.f32 0.0, %v1094
        %v1096 = vpop.f32.mrb[0].mxu0
        %v1097 = vpop.f32.mrb[0].mxu0
        %v1098 = vadd.f32 0.0, %v1097
        %v1099 = vpop.f32.mrb[0].mxu0
        %1100 = vmatprep.mubr.bf16.mxu0 0
        %1101 = vmatmul.mubr.bf16.gmra.mrb[0].mxu0 %v399
        %v1102 = vpop.f32.mrb[0].mxu0
        %v1103 = vadd.f32 0.0, %v1102
        %v1104 = vpop.f32.mrb[0].mxu0
        %v1105 = vpop.f32.mrb[0].mxu0
        %v1106 = vadd.f32 0.0, %v1105
        %v1107 = vpop.f32.mrb[0].mxu0
        %1108 = vmatprep.mubr.bf16.mxu0 0
        %1109 = vmatmul.mubr.bf16.gmra.mrb[0].mxu0 %v400
        %v1110 = vpop.f32.mrb[0].mxu0
        %v1111 = vadd.f32 0.0, %v1110
        %v1112 = vpop.f32.mrb[0].mxu0
        %v1113 = vpop.f32.mrb[0].mxu0
        %v1114 = vadd.f32 0.0, %v1113
        %v1115 = vpop.f32.mrb[0].mxu0
        %1116 = vmatprep.mubr.bf16.mxu0 0
        %1117 = vmatmul.mubr.bf16.gmra.mrb[0].mxu0 %v401
        %v1118 = vpop.f32.mrb[0].mxu0
        %v1119 = vadd.f32 0.0, %v1118
        %v1120 = vpop.f32.mrb[0].mxu0
        %v1121 = vpop.f32.mrb[0].mxu0
        %v1122 = vadd.f32 0.0, %v1121
        %v1123 = vpop.f32.mrb[0].mxu0
        %1124 = vmatprep.mubr.bf16.mxu0 0
        %1125 = vmatmul.mubr.bf16.gmra.mrb[0].mxu0 %v402
        %v1126 = vpop.f32.mrb[0].mxu0
        %v1127 = vadd.f32 0.0, %v1126
        %v1128 = vpop.f32.mrb[0].mxu0
        %v1129 = vpop.f32.mrb[0].mxu0
        %v1130 = vadd.f32 0.0, %v1129
        %v1131 = vpop.f32.mrb[0].mxu0
        %1132 = vmatprep.mubr.bf16.mxu0 0
        %1133 = vmatmul.mubr.bf16.gmra.mrb[0].mxu0 %v403
        %v1134 = vpop.f32.mrb[0].mxu0
        %v1135 = vadd.f32 0.0, %v1134
        %v1136 = vpop.f32.mrb[0].mxu0
        %v1137 = vpop.f32.mrb[0].mxu0
        %v1138 = vadd.f32 0.0, %v1137
        %v1139 = vpop.f32.mrb[0].mxu0
        %1140 = vmatprep.mubr.bf16.mxu0 0
        %1141 = vmatmul.mubr.bf16.gmra.mrb[0].mxu0 %v404
        %v1142 = vpop.f32.mrb[0].mxu0
        %v1143 = vadd.f32 0.0, %v1142
        %v1144 = vpop.f32.mrb[0].mxu0
        %v1145 = vpop.f32.mrb[0].mxu0
        %v1146 = vadd.f32 0.0, %v1145
        %v1147 = vpop.f32.mrb[0].mxu0
        %1148 = vdwg.mxu0
        %v1149 = vpack.c.bf16 %v1090, %v1087
        %v1150 = vpack.c.bf16 %v1098, %v1095
        %v1151 = vpack.c.bf16 %v1106, %v1103
        %v1152 = vpack.c.bf16 %v1114, %v1111
        %v1153 = vpack.c.bf16 %v1122, %v1119
        %v1154 = vpack.c.bf16 %v1130, %v1127
        %v1155 = vpack.c.bf16 %v1138, %v1135
        %v1156 = vpack.c.bf16 %v1146, %v1143
        %s1157 = scalar_lea.vmem [#allocation8], 128
        %v1158 = vld [vmem:[%s1157] sm:$0xf]
        %v1159 = vld [vmem:[%s1157 + $0x4] sm:$0xf]
        %v1160 = vld [vmem:[%s1157 + $0x8] sm:$0xf]
        %v1161 = vld [vmem:[%s1157 + $0xc] sm:$0xf]
        %v1162 = vld [vmem:[%s1157 + $0x10] sm:$0xf]
        %v1163 = vld [vmem:[%s1157 + $0x14] sm:$0xf]
        %v1164 = vld [vmem:[%s1157 + $0x18] sm:$0xf]
        %v1165 = vld [vmem:[%s1157 + $0x1c] sm:$0xf]
        %v1166 = vld [vmem:[%s1157 + $0x20] sm:$0xf]
        %v1167 = vld [vmem:[%s1157 + $0x24] sm:$0xf]
        %v1168 = vld [vmem:[%s1157 + $0x28] sm:$0xf]
        %v1169 = vld [vmem:[%s1157 + $0x2c] sm:$0xf]
        %v1170 = vld [vmem:[%s1157 + $0x30] sm:$0xf]
        %v1171 = vld [vmem:[%s1157 + $0x34] sm:$0xf]
        %v1172 = vld [vmem:[%s1157 + $0x38] sm:$0xf]
        %v1173 = vld [vmem:[%s1157 + $0x3c] sm:$0xf]
        %v1174 = vld [vmem:[%s4 + $0x2] sm:$0x1]
        %v1175 = vlaneseq
        %v1176 = vshrl.u32 %v1175, 7
        %v1177 = vsub.s32 0, %v1176
        %v1178 = vrot.slane %v1174, %v1177
        %v1195 = vunpack.c.l.b16 %v1158
        %v1196 = vunpack.c.l.b16 %v1159
        %v1197 = vunpack.c.l.b16 %v1160
        %v1198 = vunpack.c.l.b16 %v1161
        %v1199 = vunpack.c.l.b16 %v1162
        %v1200 = vunpack.c.l.b16 %v1163
        %v1201 = vunpack.c.l.b16 %v1164
        %v1202 = vunpack.c.l.b16 %v1165
        %v1203 = vunpack.c.l.b16 %v1166
        %v1204 = vunpack.c.l.b16 %v1167
        %v1205 = vunpack.c.l.b16 %v1168
        %v1206 = vunpack.c.l.b16 %v1169
        %v1207 = vunpack.c.l.b16 %v1170
        %v1208 = vunpack.c.l.b16 %v1171
        %v1209 = vunpack.c.l.b16 %v1172
        %v1210 = vunpack.c.l.b16 %v1173
        %v1211 = vpack.c.b16 %v1196, %v1195
        %v1212 = vpack.c.b16 %v1198, %v1197
        %v1213 = vpack.c.b16 %v1200, %v1199
        %v1214 = vpack.c.b16 %v1202, %v1201
        %v1215 = vpack.c.b16 %v1204, %v1203
        %v1216 = vpack.c.b16 %v1206, %v1205
        %v1217 = vpack.c.b16 %v1208, %v1207
        %v1218 = vpack.c.b16 %v1210, %v1209
        %1227 = vmatprep.subr.bf16.mxu0 0
        %1228 = vmatpush1.bf16.msra.mxu0 %v1211
        %1229 = vmatprep.subr.bf16.mxu0 0
        %1230 = vmatpush1.bf16.msra.mxu0 %v1212
        %1231 = vmatprep.subr.bf16.mxu0 0
        %1232 = vmatpush1.bf16.msra.mxu0 %v1213
        %1233 = vmatprep.subr.bf16.mxu0 0
        %1234 = vmatpush1.bf16.msra.mxu0 %v1214
        %1235 = vmatprep.subr.bf16.mxu0 0
        %1236 = vmatpush1.bf16.msra.mxu0 %v1215
        %1237 = vmatprep.subr.bf16.mxu0 0
        %1238 = vmatpush1.bf16.msra.mxu0 %v1216
        %1239 = vmatprep.subr.bf16.mxu0 0
        %1240 = vmatpush1.bf16.msra.mxu0 %v1217
        %1241 = vmatprep.subr.bf16.mxu0 0
        %1242 = vmatpush1.bf16.msra.mxu0 %v1218
        %1243 = vmatprep.subr.bf16.mxu0 0
        %1244 = vmatpush1.bf16.msra.mxu0 0
        %1245 = vmatprep.subr.bf16.mxu0 0
        %1246 = vmatpush1.bf16.msra.mxu0 0
        %1247 = vmatprep.subr.bf16.mxu0 0
        %1248 = vmatpush1.bf16.msra.mxu0 0
        %1249 = vmatprep.subr.bf16.mxu0 0
        %1250 = vmatpush1.bf16.msra.mxu0 0
        %1251 = vmatprep.subr.bf16.mxu0 0
        %1252 = vmatpush1.bf16.msra.mxu0 0
        %1253 = vmatprep.subr.bf16.mxu0 0
        %1254 = vmatpush1.bf16.msra.mxu0 0
        %1255 = vmatprep.subr.bf16.mxu0 0
        %1256 = vmatpush1.bf16.msra.mxu0 0
        %1257 = vmatprep.subr.bf16.mxu0 0
        %1258 = vmatpush1.bf16.msra.mxu0 0
        %1259 = vmatprep.mubr.bf16.mxu0 0
        %1260 = vmatmul.mubr.bf16.gmra.mrb[0].mxu0 %v1149
        %v1261 = vpop.f32.mrb[0].mxu0
        %v1262 = vadd.f32 %v1178, %v1261
        %v1263 = vpop.f32.mrb[0].mxu0
        %v1264 = vpop.f32.mrb[0].mxu0
        %v1265 = vadd.f32 %v1178, %v1264
        %v1266 = vpop.f32.mrb[0].mxu0
        %1267 = vmatprep.mubr.bf16.mxu0 0
        %1268 = vmatmul.mubr.bf16.gmra.mrb[0].mxu0 %v1150
        %v1269 = vpop.f32.mrb[0].mxu0
        %v1270 = vadd.f32 %v1178, %v1269
        %v1271 = vpop.f32.mrb[0].mxu0
        %v1272 = vpop.f32.mrb[0].mxu0
        %v1273 = vadd.f32 %v1178, %v1272
        %v1274 = vpop.f32.mrb[0].mxu0
        %1275 = vmatprep.mubr.bf16.mxu0 0
        %1276 = vmatmul.mubr.bf16.gmra.mrb[0].mxu0 %v1151
        %v1277 = vpop.f32.mrb[0].mxu0
        %v1278 = vadd.f32 %v1178, %v1277
        %v1279 = vpop.f32.mrb[0].mxu0
        %v1280 = vpop.f32.mrb[0].mxu0
        %v1281 = vadd.f32 %v1178, %v1280
        %v1282 = vpop.f32.mrb[0].mxu0
        %1283 = vmatprep.mubr.bf16.mxu0 0
        %1284 = vmatmul.mubr.bf16.gmra.mrb[0].mxu0 %v1152
        %v1285 = vpop.f32.mrb[0].mxu0
        %v1286 = vadd.f32 %v1178, %v1285
        %v1287 = vpop.f32.mrb[0].mxu0
        %v1288 = vpop.f32.mrb[0].mxu0
        %v1289 = vadd.f32 %v1178, %v1288
        %v1290 = vpop.f32.mrb[0].mxu0
        %1291 = vmatprep.mubr.bf16.mxu0 0
        %1292 = vmatmul.mubr.bf16.gmra.mrb[0].mxu0 %v1153
        %v1293 = vpop.f32.mrb[0].mxu0
        %v1294 = vadd.f32 %v1178, %v1293
        %v1295 = vpop.f32.mrb[0].mxu0
        %v1296 = vpop.f32.mrb[0].mxu0
        %v1297 = vadd.f32 %v1178, %v1296
        %v1298 = vpop.f32.mrb[0].mxu0
        %1299 = vmatprep.mubr.bf16.mxu0 0
        %1300 = vmatmul.mubr.bf16.gmra.mrb[0].mxu0 %v1154
        %v1301 = vpop.f32.mrb[0].mxu0
        %v1302 = vadd.f32 %v1178, %v1301
        %v1303 = vpop.f32.mrb[0].mxu0
        %v1304 = vpop.f32.mrb[0].mxu0
        %v1305 = vadd.f32 %v1178, %v1304
        %v1306 = vpop.f32.mrb[0].mxu0
        %1307 = vmatprep.mubr.bf16.mxu0 0
        %1308 = vmatmul.mubr.bf16.gmra.mrb[0].mxu0 %v1155
        %v1309 = vpop.f32.mrb[0].mxu0
        %v1310 = vadd.f32 %v1178, %v1309
        %v1311 = vpop.f32.mrb[0].mxu0
        %v1312 = vpop.f32.mrb[0].mxu0
        %v1313 = vadd.f32 %v1178, %v1312
        %v1314 = vpop.f32.mrb[0].mxu0
        %1315 = vmatprep.mubr.bf16.mxu0 0
        %1316 = vmatmul.mubr.bf16.gmra.mrb[0].mxu0 %v1156
        %v1317 = vpop.f32.mrb[0].mxu0
        %v1318 = vadd.f32 %v1178, %v1317
        %v1319 = vpop.f32.mrb[0].mxu0
        %v1320 = vpop.f32.mrb[0].mxu0
        %v1321 = vadd.f32 %v1178, %v1320
        %v1322 = vpop.f32.mrb[0].mxu0
        %1323 = vdwg.mxu0
        %v1324 = vmax.f32 %v1262, 0.0
        %v1325 = vmax.f32 %v1265, 0.0
        %v1326 = vmax.f32 %v1270, 0.0
        %v1327 = vmax.f32 %v1273, 0.0
        %v1328 = vmax.f32 %v1278, 0.0
        %v1329 = vmax.f32 %v1281, 0.0
        %v1330 = vmax.f32 %v1286, 0.0
        %v1331 = vmax.f32 %v1289, 0.0
        %v1332 = vmax.f32 %v1294, 0.0
        %v1333 = vmax.f32 %v1297, 0.0
        %v1334 = vmax.f32 %v1302, 0.0
        %v1335 = vmax.f32 %v1305, 0.0
        %v1336 = vmax.f32 %v1310, 0.0
        %v1337 = vmax.f32 %v1313, 0.0
        %v1338 = vmax.f32 %v1318, 0.0
        %v1339 = vmax.f32 %v1321, 0.0
        %v1340 = vld [vmem:[%s291] sm:$0xff]
        %1341 = vmatprep.subr.mxu0 0.0
        %1342 = vmatpush1.msra.mxu0 %v1324
        %1343 = vmatprep.subr.mxu0 0.0
        %1344 = vmatpush1.msra.mxu0 %v1325
        %1345 = vmatprep.subr.mxu0 0.0
        %1346 = vmatpush1.msra.mxu0 %v1326
        %1347 = vmatprep.subr.mxu0 0.0
        %1348 = vmatpush1.msra.mxu0 %v1327
        %1349 = vmatprep.subr.mxu0 0.0
        %1350 = vmatpush1.msra.mxu0 %v1328
        %1351 = vmatprep.subr.mxu0 0.0
        %1352 = vmatpush1.msra.mxu0 %v1329
        %1353 = vmatprep.subr.mxu0 0.0
        %1354 = vmatpush1.msra.mxu0 %v1330
        %1355 = vmatprep.subr.mxu0 0.0
        %1356 = vmatpush1.msra.mxu0 %v1331
        %1357 = vmatprep.subr.mxu0 0.0
        %1358 = vmatpush1.msra.mxu0 %v1332
        %1359 = vmatprep.subr.mxu0 0.0
        %1360 = vmatpush1.msra.mxu0 %v1333
        %1361 = vmatprep.subr.mxu0 0.0
        %1362 = vmatpush1.msra.mxu0 %v1334
        %1363 = vmatprep.subr.mxu0 0.0
        %1364 = vmatpush1.msra.mxu0 %v1335
        %1365 = vmatprep.subr.mxu0 0.0
        %1366 = vmatpush1.msra.mxu0 %v1336
        %1367 = vmatprep.subr.mxu0 0.0
        %1368 = vmatpush1.msra.mxu0 %v1337
        %1369 = vmatprep.subr.mxu0 0.0
        %1370 = vmatpush1.msra.mxu0 %v1338
        %1371 = vmatprep.subr.mxu0 0.0
        %1372 = vmatpush1.msra.mxu0 %v1339
        %1373 = vmatprep.subr.mxu0 0.0
        %1374 = vmatpush1.msra.mxu0 0.0
        %1375 = vmatprep.subr.mxu0 0.0
        %1376 = vmatpush1.msra.mxu0 0.0
        %1377 = vmatprep.subr.mxu0 0.0
        %1378 = vmatpush1.msra.mxu0 0.0
        %1379 = vmatprep.subr.mxu0 0.0
        %1380 = vmatpush1.msra.mxu0 0.0
        %1381 = vmatprep.subr.mxu0 0.0
        %1382 = vmatpush1.msra.mxu0 0.0
        %1383 = vmatprep.subr.mxu0 0.0
        %1384 = vmatpush1.msra.mxu0 0.0
        %1385 = vmatprep.subr.mxu0 0.0
        %1386 = vmatpush1.msra.mxu0 0.0
        %1387 = vmatprep.subr.mxu0 0.0
        %1388 = vmatpush1.msra.mxu0 0.0
        %1389 = vmatprep.subr.mxu0 0.0
        %1390 = vmatpush1.msra.mxu0 0.0
        %1391 = vmatprep.subr.mxu0 0.0
        %1392 = vmatpush1.msra.mxu0 0.0
        %1393 = vmatprep.subr.mxu0 0.0
        %1394 = vmatpush1.msra.mxu0 0.0
        %1395 = vmatprep.subr.mxu0 0.0
        %1396 = vmatpush1.msra.mxu0 0.0
        %1397 = vmatprep.subr.mxu0 0.0
        %1398 = vmatpush1.msra.mxu0 0.0
        %1399 = vmatprep.subr.mxu0 0.0
        %1400 = vmatpush1.msra.mxu0 0.0
        %1401 = vmatprep.subr.mxu0 0.0
        %1402 = vmatpush1.msra.mxu0 0.0
        %1403 = vmatprep.subr.mxu0 0.0
        %1404 = vmatpush1.msra.mxu0 0.0
        %1405 = vmatprep.mubr.f32.mxu0 0.0
        %1406 = vmatmul.mubr.f32.gmra.mrb[0].mxu0 %v1340
        %v1407 = vpop.f32.mrb[0].mxu0
        %v1408 = vadd.f32 0.0, %v1407
        %v1409 = vpop.f32.mrb[0].mxu0
        %1410 = vdwg.mxu0
        %v1411 = vpack.c.bf16 %v1408, %v1408
        %s1412 = scalar_lea.vmem [#allocation8], 192
        %v1413 = vld [vmem:[%s1412] sm:$0xf]
        %v1414 = vld [vmem:[%s1412 + $0x4] sm:$0xf]
        %v1415 = vld [vmem:[%s1412 + $0x8] sm:$0xf]
        %v1416 = vld [vmem:[%s1412 + $0xc] sm:$0xf]
        %v1417 = vld [vmem:[%s1412 + $0x10] sm:$0xf]
        %v1418 = vld [vmem:[%s1412 + $0x14] sm:$0xf]
        %v1419 = vld [vmem:[%s1412 + $0x18] sm:$0xf]
        %v1420 = vld [vmem:[%s1412 + $0x1c] sm:$0xf]
        %v1421 = vld [vmem:[%s1412 + $0x20] sm:$0xf]
        %v1422 = vld [vmem:[%s1412 + $0x24] sm:$0xf]
        %v1423 = vld [vmem:[%s1412 + $0x28] sm:$0xf]
        %v1424 = vld [vmem:[%s1412 + $0x2c] sm:$0xf]
        %v1425 = vld [vmem:[%s1412 + $0x30] sm:$0xf]
        %v1426 = vld [vmem:[%s1412 + $0x34] sm:$0xf]
        %v1427 = vld [vmem:[%s1412 + $0x38] sm:$0xf]
        %v1428 = vld [vmem:[%s1412 + $0x3c] sm:$0xf]
        %v1429 = vld [vmem:[%s4 + $0x3] sm:$0x1]
        %v1430 = vlaneseq
        %v1431 = vshrl.u32 %v1430, 7
        %v1432 = vsub.s32 0, %v1431
        %v1433 = vrot.slane %v1429, %v1432
        %v1450 = vunpack.c.l.b16 %v1413
        %v1451 = vunpack.c.l.b16 %v1414
        %v1452 = vunpack.c.l.b16 %v1415
        %v1453 = vunpack.c.l.b16 %v1416
        %v1454 = vunpack.c.l.b16 %v1417
        %v1455 = vunpack.c.l.b16 %v1418
        %v1456 = vunpack.c.l.b16 %v1419
        %v1457 = vunpack.c.l.b16 %v1420
        %v1458 = vunpack.c.l.b16 %v1421
        %v1459 = vunpack.c.l.b16 %v1422
        %v1460 = vunpack.c.l.b16 %v1423
        %v1461 = vunpack.c.l.b16 %v1424
        %v1462 = vunpack.c.l.b16 %v1425
        %v1463 = vunpack.c.l.b16 %v1426
        %v1464 = vunpack.c.l.b16 %v1427
        %v1465 = vunpack.c.l.b16 %v1428
        %v1466 = vpack.c.b16 %v1451, %v1450
        %v1467 = vpack.c.b16 %v1453, %v1452
        %v1468 = vpack.c.b16 %v1455, %v1454
        %v1469 = vpack.c.b16 %v1457, %v1456
        %v1470 = vpack.c.b16 %v1459, %v1458
        %v1471 = vpack.c.b16 %v1461, %v1460
        %v1472 = vpack.c.b16 %v1463, %v1462
        %v1473 = vpack.c.b16 %v1465, %v1464
        %1482 = vmatprep.subr.bf16.mxu0 0
        %1483 = vmatpush1.bf16.msra.mxu0 %v1466
        %1484 = vmatprep.subr.bf16.mxu0 0
        %1485 = vmatpush1.bf16.msra.mxu0 %v1467
        %1486 = vmatprep.subr.bf16.mxu0 0
        %1487 = vmatpush1.bf16.msra.mxu0 %v1468
        %1488 = vmatprep.subr.bf16.mxu0 0
        %1489 = vmatpush1.bf16.msra.mxu0 %v1469
        %1490 = vmatprep.subr.bf16.mxu0 0
        %1491 = vmatpush1.bf16.msra.mxu0 %v1470
        %1492 = vmatprep.subr.bf16.mxu0 0
        %1493 = vmatpush1.bf16.msra.mxu0 %v1471
        %1494 = vmatprep.subr.bf16.mxu0 0
        %1495 = vmatpush1.bf16.msra.mxu0 %v1472
        %1496 = vmatprep.subr.bf16.mxu0 0
        %1497 = vmatpush1.bf16.msra.mxu0 %v1473
        %1498 = vmatprep.subr.bf16.mxu0 0
        %1499 = vmatpush1.bf16.msra.mxu0 0
        %1500 = vmatprep.subr.bf16.mxu0 0
        %1501 = vmatpush1.bf16.msra.mxu0 0
        %1502 = vmatprep.subr.bf16.mxu0 0
        %1503 = vmatpush1.bf16.msra.mxu0 0
        %1504 = vmatprep.subr.bf16.mxu0 0
        %1505 = vmatpush1.bf16.msra.mxu0 0
        %1506 = vmatprep.subr.bf16.mxu0 0
        %1507 = vmatpush1.bf16.msra.mxu0 0
        %1508 = vmatprep.subr.bf16.mxu0 0
        %1509 = vmatpush1.bf16.msra.mxu0 0
        %1510 = vmatprep.subr.bf16.mxu0 0
        %1511 = vmatpush1.bf16.msra.mxu0 0
        %1512 = vmatprep.subr.bf16.mxu0 0
        %1513 = vmatpush1.bf16.msra.mxu0 0
        %1514 = vmatprep.mubr.bf16.mxu0 0
        %1515 = vmatmul.mubr.bf16.gmra.mrb[0].mxu0 %v1411
        %v1516 = vpop.f32.mrb[0].mxu0
        %v1517 = vadd.f32 %v1433, %v1516
        %v1518 = vpop.f32.mrb[0].mxu0
        %v1519 = vpop.f32.mrb[0].mxu0
        %v1520 = vpop.f32.mrb[0].mxu0
        %1521 = vdwg.mxu0
        %v1522 = vmax.f32 %v1517, 0.0
        %v1523 = vpack.c.bf16 %v1522, %v1522
        %s1524 = scalar_lea.vmem [#allocation8], 256
        %v1525 = vld [vmem:[%s1524] sm:$0xf]
        %v1526 = vld [vmem:[%s1524 + $0x4] sm:$0xf]
        %v1527 = vld [vmem:[%s1524 + $0x8] sm:$0xf]
        %v1528 = vld [vmem:[%s1524 + $0xc] sm:$0xf]
        %v1529 = vld [vmem:[%s1524 + $0x10] sm:$0xf]
        %v1530 = vld [vmem:[%s1524 + $0x14] sm:$0xf]
        %v1531 = vld [vmem:[%s1524 + $0x18] sm:$0xf]
        %v1532 = vld [vmem:[%s1524 + $0x1c] sm:$0xf]
        %v1533 = vld [vmem:[%s1524 + $0x20] sm:$0xf]
        %v1534 = vld [vmem:[%s1524 + $0x24] sm:$0xf]
        %v1535 = vld [vmem:[%s1524 + $0x28] sm:$0xf]
        %v1536 = vld [vmem:[%s1524 + $0x2c] sm:$0xf]
        %v1537 = vld [vmem:[%s1524 + $0x30] sm:$0xf]
        %v1538 = vld [vmem:[%s1524 + $0x34] sm:$0xf]
        %v1539 = vld [vmem:[%s1524 + $0x38] sm:$0xf]
        %v1540 = vld [vmem:[%s1524 + $0x3c] sm:$0xf]
        %v1541 = vld [vmem:[%s4 + $0x4] sm:$0x1]
        %v1542 = vlaneseq
        %v1543 = vshrl.u32 %v1542, 7
        %v1544 = vsub.s32 0, %v1543
        %v1545 = vrot.slane %v1541, %v1544
        %v1562 = vunpack.c.l.b16 %v1525
        %v1563 = vunpack.c.l.b16 %v1526
        %v1564 = vunpack.c.l.b16 %v1527
        %v1565 = vunpack.c.l.b16 %v1528
        %v1566 = vunpack.c.l.b16 %v1529
        %v1567 = vunpack.c.l.b16 %v1530
        %v1568 = vunpack.c.l.b16 %v1531
        %v1569 = vunpack.c.l.b16 %v1532
        %v1570 = vunpack.c.l.b16 %v1533
        %v1571 = vunpack.c.l.b16 %v1534
        %v1572 = vunpack.c.l.b16 %v1535
        %v1573 = vunpack.c.l.b16 %v1536
        %v1574 = vunpack.c.l.b16 %v1537
        %v1575 = vunpack.c.l.b16 %v1538
        %v1576 = vunpack.c.l.b16 %v1539
        %v1577 = vunpack.c.l.b16 %v1540
        %v1578 = vpack.c.b16 %v1563, %v1562
        %v1579 = vpack.c.b16 %v1565, %v1564
        %v1580 = vpack.c.b16 %v1567, %v1566
        %v1581 = vpack.c.b16 %v1569, %v1568
        %v1582 = vpack.c.b16 %v1571, %v1570
        %v1583 = vpack.c.b16 %v1573, %v1572
        %v1584 = vpack.c.b16 %v1575, %v1574
        %v1585 = vpack.c.b16 %v1577, %v1576
        %1594 = vmatprep.subr.bf16.mxu0 0
        %1595 = vmatpush1.bf16.msra.mxu0 %v1578
        %1596 = vmatprep.subr.bf16.mxu0 0
        %1597 = vmatpush1.bf16.msra.mxu0 %v1579
        %1598 = vmatprep.subr.bf16.mxu0 0
        %1599 = vmatpush1.bf16.msra.mxu0 %v1580
        %1600 = vmatprep.subr.bf16.mxu0 0
        %1601 = vmatpush1.bf16.msra.mxu0 %v1581
        %1602 = vmatprep.subr.bf16.mxu0 0
        %1603 = vmatpush1.bf16.msra.mxu0 %v1582
        %1604 = vmatprep.subr.bf16.mxu0 0
        %1605 = vmatpush1.bf16.msra.mxu0 %v1583
        %1606 = vmatprep.subr.bf16.mxu0 0
        %1607 = vmatpush1.bf16.msra.mxu0 %v1584
        %1608 = vmatprep.subr.bf16.mxu0 0
        %1609 = vmatpush1.bf16.msra.mxu0 %v1585
        %1610 = vmatprep.subr.bf16.mxu0 0
        %1611 = vmatpush1.bf16.msra.mxu0 0
        %1612 = vmatprep.subr.bf16.mxu0 0
        %1613 = vmatpush1.bf16.msra.mxu0 0
        %1614 = vmatprep.subr.bf16.mxu0 0
        %1615 = vmatpush1.bf16.msra.mxu0 0
        %1616 = vmatprep.subr.bf16.mxu0 0
        %1617 = vmatpush1.bf16.msra.mxu0 0
        %1618 = vmatprep.subr.bf16.mxu0 0
        %1619 = vmatpush1.bf16.msra.mxu0 0
        %1620 = vmatprep.subr.bf16.mxu0 0
        %1621 = vmatpush1.bf16.msra.mxu0 0
        %1622 = vmatprep.subr.bf16.mxu0 0
        %1623 = vmatpush1.bf16.msra.mxu0 0
        %1624 = vmatprep.subr.bf16.mxu0 0
        %1625 = vmatpush1.bf16.msra.mxu0 0
        %1626 = vmatprep.mubr.bf16.mxu0 0
        %1627 = vmatmul.mubr.bf16.gmra.mrb[0].mxu0 %v1523
        %v1628 = vpop.f32.mrb[0].mxu0
        %v1629 = vadd.f32 %v1545, %v1628
        %v1630 = vpop.f32.mrb[0].mxu0
        %v1631 = vpop.f32.mrb[0].mxu0
        %v1632 = vpop.f32.mrb[0].mxu0
        %1633 = vdwg.mxu0
        %v1634 = vmax.f32 %v1629, 0.0
        %v1635 = vpack.c.bf16 %v1634, %v1634
        %s1636 = scalar_lea.vmem [#allocation8], 320
        %v1637 = vld [vmem:[%s1636] sm:$0xf]
        %v1638 = vld [vmem:[%s1636 + $0x4] sm:$0xf]
        %v1639 = vld [vmem:[%s1636 + $0x8] sm:$0xf]
        %v1640 = vld [vmem:[%s1636 + $0xc] sm:$0xf]
        %v1641 = vld [vmem:[%s1636 + $0x10] sm:$0xf]
        %v1642 = vld [vmem:[%s1636 + $0x14] sm:$0xf]
        %v1643 = vld [vmem:[%s1636 + $0x18] sm:$0xf]
        %v1644 = vld [vmem:[%s1636 + $0x1c] sm:$0xf]
        %v1645 = vld [vmem:[%s1636 + $0x20] sm:$0xf]
        %v1646 = vld [vmem:[%s1636 + $0x24] sm:$0xf]
        %v1647 = vld [vmem:[%s1636 + $0x28] sm:$0xf]
        %v1648 = vld [vmem:[%s1636 + $0x2c] sm:$0xf]
        %v1649 = vld [vmem:[%s1636 + $0x30] sm:$0xf]
        %v1650 = vld [vmem:[%s1636 + $0x34] sm:$0xf]
        %v1651 = vld [vmem:[%s1636 + $0x38] sm:$0xf]
        %v1652 = vld [vmem:[%s1636 + $0x3c] sm:$0xf]
        %v1653 = vld [vmem:[%s4 + $0x5] sm:$0x1]
        %v1654 = vlaneseq
        %v1655 = vshrl.u32 %v1654, 7
        %v1656 = vsub.s32 0, %v1655
        %v1657 = vrot.slane %v1653, %v1656
        %v1674 = vunpack.c.l.b16 %v1637
        %v1675 = vunpack.c.l.b16 %v1638
        %v1676 = vunpack.c.l.b16 %v1639
        %v1677 = vunpack.c.l.b16 %v1640
        %v1678 = vunpack.c.l.b16 %v1641
        %v1679 = vunpack.c.l.b16 %v1642
        %v1680 = vunpack.c.l.b16 %v1643
        %v1681 = vunpack.c.l.b16 %v1644
        %v1682 = vunpack.c.l.b16 %v1645
        %v1683 = vunpack.c.l.b16 %v1646
        %v1684 = vunpack.c.l.b16 %v1647
        %v1685 = vunpack.c.l.b16 %v1648
        %v1686 = vunpack.c.l.b16 %v1649
        %v1687 = vunpack.c.l.b16 %v1650
        %v1688 = vunpack.c.l.b16 %v1651
        %v1689 = vunpack.c.l.b16 %v1652
        %v1690 = vpack.c.b16 %v1675, %v1674
        %v1691 = vpack.c.b16 %v1677, %v1676
        %v1692 = vpack.c.b16 %v1679, %v1678
        %v1693 = vpack.c.b16 %v1681, %v1680
        %v1694 = vpack.c.b16 %v1683, %v1682
        %v1695 = vpack.c.b16 %v1685, %v1684
        %v1696 = vpack.c.b16 %v1687, %v1686
        %v1697 = vpack.c.b16 %v1689, %v1688
        %1706 = vmatprep.subr.bf16.mxu0 0
        %1707 = vmatpush1.bf16.msra.mxu0 %v1690
        %1708 = vmatprep.subr.bf16.mxu0 0
        %1709 = vmatpush1.bf16.msra.mxu0 %v1691
        %1710 = vmatprep.subr.bf16.mxu0 0
        %1711 = vmatpush1.bf16.msra.mxu0 %v1692
        %1712 = vmatprep.subr.bf16.mxu0 0
        %1713 = vmatpush1.bf16.msra.mxu0 %v1693
        %1714 = vmatprep.subr.bf16.mxu0 0
        %1715 = vmatpush1.bf16.msra.mxu0 %v1694
        %1716 = vmatprep.subr.bf16.mxu0 0
        %1717 = vmatpush1.bf16.msra.mxu0 %v1695
        %1718 = vmatprep.subr.bf16.mxu0 0
        %1719 = vmatpush1.bf16.msra.mxu0 %v1696
        %1720 = vmatprep.subr.bf16.mxu0 0
        %1721 = vmatpush1.bf16.msra.mxu0 %v1697
        %1722 = vmatprep.subr.bf16.mxu0 0
        %1723 = vmatpush1.bf16.msra.mxu0 0
        %1724 = vmatprep.subr.bf16.mxu0 0
        %1725 = vmatpush1.bf16.msra.mxu0 0
        %1726 = vmatprep.subr.bf16.mxu0 0
        %1727 = vmatpush1.bf16.msra.mxu0 0
        %1728 = vmatprep.subr.bf16.mxu0 0
        %1729 = vmatpush1.bf16.msra.mxu0 0
        %1730 = vmatprep.subr.bf16.mxu0 0
        %1731 = vmatpush1.bf16.msra.mxu0 0
        %1732 = vmatprep.subr.bf16.mxu0 0
        %1733 = vmatpush1.bf16.msra.mxu0 0
        %1734 = vmatprep.subr.bf16.mxu0 0
        %1735 = vmatpush1.bf16.msra.mxu0 0
        %1736 = vmatprep.subr.bf16.mxu0 0
        %1737 = vmatpush1.bf16.msra.mxu0 0
        %1738 = vmatprep.mubr.bf16.mxu0 0
        %1739 = vmatmul.mubr.bf16.gmra.mrb[0].mxu0 %v1635
        %v1740 = vpop.f32.mrb[0].mxu0
        %v1741 = vadd.f32 %v1657, %v1740
        %v1742 = vpop.f32.mrb[0].mxu0
        %v1743 = vpop.f32.mrb[0].mxu0
        %v1744 = vpop.f32.mrb[0].mxu0
        %1745 = vdwg.mxu0
        %v1746 = vxor.u32 %v1741, 2147483648
        %v1747 = vmul.f32 %v1746, 1.442695
        %v1748 = vpow.pop %v1747
        %v1749 = vadd.f32 %v1748, 1.0
        %v1750 = vrcp.pop %v1749
        %v1751 = vmul.f32 1.0, %v1750
        %1752 = vst [vmem:[%s331] sm:$0xff] %v1751
        %s1753 = sand.u32 %s154, 1
        %s1754 = scalar_lea.sflag [#allocation4], %s1753
        %s1755 = sand.u32 %s154, 1
        %s1756 = smul.addr %s1755, 8
        %s1757 = scalar_lea.vmem [#allocation10], %s1756
        // Predicated region
        $region57: #{tpu_custom_call.1} parent=39 // pred_check
          %p1758 = pneg %p164
        $region58: #{tpu_custom_call.1} parent=39 // pred_check_branch
          %1760 = sbr.rel (%p1758) target = $region60
        $region59: #{tpu_custom_call.1} parent=39 // pred_region
          %s1762 = ssub.s32 128, 128
          %1763 = vsyncadd %s1754, %s1762
          %s1764 = smul.addr %s26, 128
          %s1765 = scalar_lea.hbm %s5, %s1764
          %s1767 = sshll.u32 %s1757, 4
          %s1768 = int_to_ptr.vmem [resolvable:$true] %s1767
          %1770 = dma.vmem_to_hbm [thread:$0]  %s1768, 128, %s1765, %s1754
        $region60: #{tpu_custom_call.1} parent=39 // pred_fallthru
          _
      $region40: #{tpu_custom_call.1} parent=5 // pred_fallthru
        _
      %p1771 = scmp.le.s32.totalorder 2, %s21
      // Predicated region
      $region61: #{tpu_custom_call.1} parent=5 // pred_check
        %p1772 = pneg %p1771
      $region62: #{tpu_custom_call.1} parent=5 // pred_check_branch
        %1774 = sbr.rel (%p1772) target = $region64
      $region63: #{tpu_custom_call.1} parent=5 // pred_region
        %s1775 = ssub.s32 %s21, 2
        // Predicated region
        $region65: #{tpu_custom_call.1} parent=63 // pred_check
          %p1776 = pneg %p170
        $region66: #{tpu_custom_call.1} parent=63 // pred_check_branch
          %1778 = sbr.rel (%p1776) target = $region68
        $region67: #{tpu_custom_call.1} parent=63 // pred_region
          %s1779 = sand.u32 %s155, 1
          %s1780 = scalar_lea.sflag [#allocation4], %s1779
          %s1781 = sand.u32 %s155, 1
          %s1782 = smul.addr %s1781, 8
          %s1783 = scalar_lea.vmem [#allocation10], %s1782
          %1784 = dma.done %s1780, 128
        $region68: #{tpu_custom_call.1} parent=63 // pred_fallthru
          _
      $region64: #{tpu_custom_call.1} parent=5 // pred_fallthru
        _
    $region6: #{tpu_custom_call.1} parent=1 // loop_footer
      %s25 = sadd.s32 1, %s21
    $region7: #{tpu_custom_call.1} parent=1 // loop_footer_branch
      %20 = sbr.rel target = $region3
    $region8: #{tpu_custom_call.1} parent=1 // loop_exit
      _
    %1785 = vsyncpa [#allocation3], 1
    %s1786 = scalar_lea.sflag [#allocation3], 1
    %1787 = vsyncpa %s1786, 1
    %1788 = vsyncpa [#allocation6], 1
    %s1789 = scalar_lea.sflag [#allocation6], 1
    %1790 = vsyncpa %s1789, 1
    %1791 = vsyncpa [#allocation9], 1
    %1792 = vsyncpa [#allocation4], 1
    %s1793 = scalar_lea.sflag [#allocation4], 1
    %1794 = vsyncpa %s1793, 1

</llo_original>
